<compile_context>
chip_gen: v7x
topology: tpu7x:2x2x1
jax: 0.10.0
libtpu: 0.0.40
codegen_flags: <defaults>
</compile_context>

<pallas_src>
import math

import jax
import jax.numpy as jnp
from jax.experimental import pallas as pl
from jax.experimental.pallas import tpu as pltpu

# ----------------------------- problem sizes --------------------------------
B, S, H = 2, 8, 32          # batch, seq, hidden
NUM_HEADS = 4
HEAD_DIM = H // NUM_HEADS
INTER = 4 * H               # FFN intermediate size (128)
VOCAB = 128                 # toy vocab, multiple of 128 -> lane-dense logits
LN_EPS = 1e-12              # BERT LayerNorm eps
_SQRT2_INV = 1.0 / math.sqrt(2.0)


# ------------------------------ kernel helpers -------------------------------
def _layer_norm(x, gamma, beta):
    mu = jnp.mean(x, axis=-1, keepdims=True)
    var = jnp.mean((x - mu) ** 2, axis=-1, keepdims=True)
    return (x - mu) * jax.lax.rsqrt(var + LN_EPS) * gamma + beta


def _gelu_exact(x):
    # exact (erf) GELU, matching HF BERT's default activation
    return 0.5 * x * (1.0 + jax.lax.erf(x * _SQRT2_INV))


# ------------------------------ Pallas kernel --------------------------------
def bert_last_block_kernel(
    x_ref, mask_ref,
    wqkv_ref, bqkv_ref, wo_ref, bo_ref, ln1_g_ref, ln1_b_ref,
    wi_ref, bi_ref, wo2_ref, bo2_ref, ln2_g_ref, ln2_b_ref,
    wt_ref, bt_ref, ln3_g_ref, ln3_b_ref, wd_ref, bd_ref,
    seq_ref, logits_ref,
):
    x = x_ref[...]        # [S, H]
    mask = mask_ref[...]  # [1, S], additive

    # Hoist all [1, *] params: single vld each, reused everywhere below.
    b_qkv = bqkv_ref[...]
    b_o = bo_ref[...]
    ln1_g, ln1_b = ln1_g_ref[...], ln1_b_ref[...]
    b_i = bi_ref[...]
    b_o2 = bo2_ref[...]
    ln2_g, ln2_b = ln2_g_ref[...], ln2_b_ref[...]
    b_t = bt_ref[...]
    ln3_g, ln3_b = ln3_g_ref[...], ln3_b_ref[...]
    b_d = bd_ref[...]

    # ---- fused QKV projection: one MXU matmul instead of three ----
    qkv = jnp.dot(x, wqkv_ref[...], preferred_element_type=jnp.float32) + b_qkv  # [S, 3H]
    q = qkv[:, 0:H]
    k = qkv[:, H:2 * H]
    v = qkv[:, 2 * H:3 * H]

    # ---- per-head scaled dot-product attention; context stays in vregs ----
    scale = 1.0 / math.sqrt(HEAD_DIM)
    ctx_heads = []
    for h in range(NUM_HEADS):
        lo = h * HEAD_DIM
        qh = q[:, lo:lo + HEAD_DIM]
        kh = k[:, lo:lo + HEAD_DIM]
        vh = v[:, lo:lo + HEAD_DIM]
        # scores[q, k] = qh . kh  (contract head dim, no explicit transpose)
        scores = jax.lax.dot_general(
            qh, kh, (((1,), (1,)), ((), ())),
            preferred_element_type=jnp.float32) * scale
        scores = scores + mask                                   # [S,S] + [1,S]
        scores = scores - jnp.max(scores, axis=-1, keepdims=True)
        p = jnp.exp(scores)
        inv_denom = pl.reciprocal(jnp.sum(p, axis=-1, keepdims=True), approx=True)
        p = p * inv_denom
        ctx_heads.append(jnp.dot(p, vh, preferred_element_type=jnp.float32))
    ctx = jnp.concatenate(ctx_heads, axis=-1)                    # [S, H], no scratch

    # ---- attention output projection + residual + LayerNorm ----
    attn_out = jnp.dot(ctx, wo_ref[...],
                       preferred_element_type=jnp.float32) + b_o
    h1 = _layer_norm(attn_out + x, ln1_g, ln1_b)

    # ---- FFN + residual + LayerNorm ----
    inter = jnp.dot(h1, wi_ref[...], preferred_element_type=jnp.float32) + b_i
    inter = _gelu_exact(inter)
    ffn = jnp.dot(inter, wo2_ref[...], preferred_element_type=jnp.float32) + b_o2
    seq = _layer_norm(ffn + h1, ln2_g, ln2_b)
    seq_ref[...] = seq

    # ---- MLM head (cls): transform -> GELU -> LayerNorm -> vocab decoder ----
    t = jnp.dot(seq, wt_ref[...], preferred_element_type=jnp.float32) + b_t
    t = _gelu_exact(t)
    t = _layer_norm(t, ln3_g, ln3_b)
    logits_ref[...] = jnp.dot(t, wd_ref[...],
                              preferred_element_type=jnp.float32) + b_d   # [S, VOCAB]


_FUSED_PARAM_ORDER = ("wqkv", "bqkv", "wo", "bo", "ln1_g", "ln1_b",
                      "wi", "bi", "wo2", "bo2", "ln2_g", "ln2_b",
                      "wt", "bt", "ln3_g", "ln3_b", "wd", "bd")


def bert_last_block_pallas(hidden_states, ext_mask, params):
    """hidden_states: [B,S,H] f32; ext_mask: [B,1,1,S] additive f32.

    Returns (sequence_output [B,S,H], prediction_scores [B,S,VOCAB])."""
    mask2 = ext_mask.reshape(B, 1, S).astype(jnp.float32)

    fused = dict(params)
    fused["wqkv"] = jnp.concatenate([params["wq"], params["wk"], params["wv"]], axis=1)
    fused["bqkv"] = jnp.concatenate([params["bq"], params["bk"], params["bv"]], axis=1)
    param_list = [fused[name] for name in _FUSED_PARAM_ORDER]

    def wspec(p):
        # full 2-D array as one block, same block for every grid step
        return pl.BlockSpec(p.shape, lambda b: (0, 0))

    in_specs = [
        pl.BlockSpec((None, S, H), lambda b: (b, 0, 0)),   # hidden_states
        pl.BlockSpec((None, 1, S), lambda b: (b, 0, 0)),   # additive mask
    ] + [wspec(p) for p in param_list]

    out_shape = (jax.ShapeDtypeStruct((B, S, H), jnp.float32),
                 jax.ShapeDtypeStruct((B, S, VOCAB), jnp.float32))
    out_specs = (pl.BlockSpec((None, S, H), lambda b: (b, 0, 0)),
                 pl.BlockSpec((None, S, VOCAB), lambda b: (b, 0, 0)))

    return pl.pallas_call(
        bert_last_block_kernel,
        out_shape=out_shape,
        grid=(B,),
        in_specs=in_specs,
        out_specs=out_specs,
        compiler_params=pltpu.CompilerParams(
            dimension_semantics=("parallel",)),
    )(hidden_states, mask2, *param_list)


# ------------------------- HF-style output containers ------------------------
class _ModelOutput:
    _order = ()

    def __init__(self, **kwargs):
        for name in self._order:
            setattr(self, name, kwargs.get(name))

    def _values(self):
        return [getattr(self, n) for n in self._order if getattr(self, n) is not None]

    def __getitem__(self, idx):
        return self._values()[idx]


class BaseModelOutputWithPastAndCrossAttentions(_ModelOutput):
    _order = ("last_hidden_state", "past_key_values", "hidden_states",
              "attentions", "cross_attentions")


class BaseModelOutputWithPoolingAndCrossAttentions(_ModelOutput):
    _order = ("last_hidden_state", "pooler_output", "past_key_values",
              "hidden_states", "attentions", "cross_attentions")


class MaskedLMOutput(_ModelOutput):
    _order = ("loss", "logits", "hidden_states", "attentions")


# ----------------------- BertLastBlock forward (glue) ------------------------
class BertLastBlockPallas:
    def __init__(self, params):
        self.params = params
        self.pooler = None   # matches the reference module (pooler is None)

    def forward(self, inputs):
        (hidden_states, attention_mask, head_mask, encoder_hidden_states,
         encoder_attention_mask, past_key_values, output_attentions, index,
         all_hidden_states, all_self_attentions, all_cross_attentions,
         next_decoder_cache, output_hidden_states, use_cache,
         add_cross_attention, return_dict) = inputs

        if output_hidden_states:
            all_hidden_states = all_hidden_states + (hidden_states,)
        layer_head_mask = head_mask[index] if head_mask is not None else None
        past_key_value = past_key_values[index] if past_key_values is not None else None
        # TODO(synk): layer_head_mask scaling, past_key_value concat/caching,
        # cross-attention and attention-prob outputs are not implemented in the
        # fused Pallas layer; they are None/False in this configuration.
        del layer_head_mask, past_key_value

        seq, logits = bert_last_block_pallas(hidden_states, attention_mask, self.params)
        layer_outputs = (seq,)
        hidden_states = layer_outputs[0]
        if use_cache:
            next_decoder_cache += (layer_outputs[-1],)
        if output_attentions:
            # TODO(synk): attention probabilities are not materialized by the kernel.
            pass
        if output_hidden_states:
            all_hidden_states = all_hidden_states + (hidden_states,)

        if not return_dict:
            encoder_outputs = tuple(
                v for v in [hidden_states, next_decoder_cache, all_hidden_states,
                            all_self_attentions, all_cross_attentions]
                if v is not None)
        else:
            encoder_outputs = BaseModelOutputWithPastAndCrossAttentions(
                last_hidden_state=hidden_states,
                past_key_values=next_decoder_cache,
                hidden_states=all_hidden_states,
                attentions=all_self_attentions,
                cross_attentions=all_cross_attentions)

        sequence_output = encoder_outputs[0]
        pooled_output = self.pooler(sequence_output) if self.pooler is not None else None
        if not return_dict:
            return (sequence_output, pooled_output) + encoder_outputs[1:]

        bert_outputs = BaseModelOutputWithPoolingAndCrossAttentions(
            last_hidden_state=sequence_output, pooler_output=pooled_output,
            past_key_values=encoder_outputs.past_key_values,
            hidden_states=encoder_outputs.hidden_states,
            attentions=encoder_outputs.attentions,
            cross_attentions=encoder_outputs.cross_attentions)
        sequence_output = bert_outputs[0]
        prediction_scores = logits   # == cls(sequence_output), fused in the kernel
        masked_lm_loss = None
        return MaskedLMOutput(loss=masked_lm_loss, logits=prediction_scores,
                              hidden_states=bert_outputs.hidden_states,
                              attentions=bert_outputs.attentions)

    __call__ = forward


# ------------------------------ pure-JAX reference ---------------------------
def bert_last_block_ref(x, ext_mask, p):
    def ln(t, g, b):
        mu = jnp.mean(t, axis=-1, keepdims=True)
        var = jnp.mean((t - mu) ** 2, axis=-1, keepdims=True)
        return (t - mu) * jax.lax.rsqrt(var + LN_EPS) * g + b

    def gelu(t):
        return 0.5 * t * (1.0 + jax.lax.erf(t / math.sqrt(2.0)))

    q = x @ p["wq"] + p["bq"]
    k = x @ p["wk"] + p["bk"]
    v = x @ p["wv"] + p["bv"]
    split = lambda t: t.reshape(B, S, NUM_HEADS, HEAD_DIM).transpose(0, 2, 1, 3)
    q, k, v = split(q), split(k), split(v)
    scores = jnp.einsum("bhqd,bhkd->bhqk", q, k) / math.sqrt(HEAD_DIM)
    scores = scores + ext_mask                      # [B,1,1,S] broadcast
    probs = jax.nn.softmax(scores, axis=-1)
    ctx = jnp.einsum("bhqk,bhkd->bhqd", probs, v).transpose(0, 2, 1, 3).reshape(B, S, H)
    attn = ctx @ p["wo"] + p["bo"]
    h1 = ln(attn + x, p["ln1_g"], p["ln1_b"])
    inter = gelu(h1 @ p["wi"] + p["bi"])
    ffn = inter @ p["wo2"] + p["bo2"]
    seq = ln(ffn + h1, p["ln2_g"], p["ln2_b"])
    # MLM head
    t = gelu(seq @ p["wt"] + p["bt"])
    t = ln(t, p["ln3_g"], p["ln3_b"])
    logits = t @ p["wd"] + p["bd"]
    return seq, logits


# ----------------------------------- main -------------------------------------
if __name__ == "__main__":
    key = jax.random.PRNGKey(0)
    ks = jax.random.split(key, 20)
    init = lambda k, shape: (0.02 * jax.random.normal(k, shape)).astype(jnp.float32)

    params = {
        "wq": init(ks[0], (H, H)),       "bq": init(ks[1], (1, H)),
        "wk": init(ks[2], (H, H)),       "bk": init(ks[3], (1, H)),
        "wv": init(ks[4], (H, H)),       "bv": init(ks[5], (1, H)),
        "wo": init(ks[6], (H, H)),       "bo": init(ks[7], (1, H)),
        "ln1_g": jnp.ones((1, H), jnp.float32), "ln1_b": jnp.zeros((1, H), jnp.float32),
        "wi": init(ks[8], (H, INTER)),   "bi": init(ks[9], (1, INTER)),
        "wo2": init(ks[10], (INTER, H)), "bo2": init(ks[11], (1, H)),
        "ln2_g": jnp.ones((1, H), jnp.float32), "ln2_b": jnp.zeros((1, H), jnp.float32),
        # MLM head (cls): transform dense + LN, then vocab decoder
        "wt": init(ks[12], (H, H)),      "bt": init(ks[13], (1, H)),
        "ln3_g": jnp.ones((1, H), jnp.float32), "ln3_b": jnp.zeros((1, H), jnp.float32),
        "wd": init(ks[14], (H, VOCAB)),  "bd": init(ks[15], (1, VOCAB)),
    }

    hidden_states = jax.random.normal(ks[16], (B, S, H), jnp.float32)
    # padding mask: last 2 tokens of batch 1 are padding
    pad_mask = jnp.ones((B, S), jnp.float32).at[1, -2:].set(0.0)
    ext_mask = (1.0 - pad_mask)[:, None, None, :] * -10000.0   # [B,1,1,S] additive

    block = BertLastBlockPallas(params)
    inputs = (hidden_states, ext_mask, None, None, None, None,
              False,        # output_attentions
              0,            # index
              None, None, None, None,   # all_hidden/self_attn/cross_attn/next_cache
              False,        # output_hidden_states
              False,        # use_cache
              False,        # add_cross_attention
              True)         # return_dict

    out = block(inputs)
    logits = jax.block_until_ready(out.logits)

    seq_ref, logits_ref = bert_last_block_ref(hidden_states, ext_mask, params)
    seq_out, logits_out = bert_last_block_pallas(hidden_states, ext_mask, params)
    seq_out = jax.block_until_ready(seq_out)

    assert logits.shape == (B, S, VOCAB)
    assert out.loss is None and out.hidden_states is None and out.attentions is None
    # tolerance covers the approx EUP reciprocal in the softmax normalization
    assert jnp.allclose(seq_out, seq_ref, atol=2e-3, rtol=2e-3), (
        float(jnp.max(jnp.abs(seq_out - seq_ref))))
    assert jnp.allclose(logits, logits_ref, atol=2e-3, rtol=2e-3), (
        float(jnp.max(jnp.abs(logits - logits_ref))))

    print("KERNEL_OK")
</pallas_src>

<mosaic_0001>
module attributes {stable_mosaic.version = 11 : i64} {
  func.func @bert_last_block_kernel(%arg0: i32, %arg1: memref<1x8x32xf32, #tpu.memory_space<vmem>>, %arg2: memref<1x1x8xf32, #tpu.memory_space<vmem>>, %arg3: memref<32x96xf32, #tpu.memory_space<vmem>>, %arg4: memref<1x96xf32, #tpu.memory_space<vmem>>, %arg5: memref<32x32xf32, #tpu.memory_space<vmem>>, %arg6: memref<1x32xf32, #tpu.memory_space<vmem>>, %arg7: memref<1x32xf32, #tpu.memory_space<vmem>>, %arg8: memref<1x32xf32, #tpu.memory_space<vmem>>, %arg9: memref<32x128xf32, #tpu.memory_space<vmem>>, %arg10: memref<1x128xf32, #tpu.memory_space<vmem>>, %arg11: memref<128x32xf32, #tpu.memory_space<vmem>>, %arg12: memref<1x32xf32, #tpu.memory_space<vmem>>, %arg13: memref<1x32xf32, #tpu.memory_space<vmem>>, %arg14: memref<1x32xf32, #tpu.memory_space<vmem>>, %arg15: memref<32x32xf32, #tpu.memory_space<vmem>>, %arg16: memref<1x32xf32, #tpu.memory_space<vmem>>, %arg17: memref<1x32xf32, #tpu.memory_space<vmem>>, %arg18: memref<1x32xf32, #tpu.memory_space<vmem>>, %arg19: memref<32x128xf32, #tpu.memory_space<vmem>>, %arg20: memref<1x128xf32, #tpu.memory_space<vmem>>, %arg21: memref<1x8x32xf32, #tpu.memory_space<vmem>>, %arg22: memref<1x8x128xf32, #tpu.memory_space<vmem>>) attributes {dimension_semantics = [#tpu.dimension_semantics<parallel>], iteration_bounds = array<i64: 2>, scalar_prefetch = 0 : i64, scratch_operands = 0 : i64, tpu.core_type = #tpu.core_type<tc>, window_params = [{transform_indices = @transform_0, window_bounds = array<i64: 1, 8, 32>}, {transform_indices = @transform_1, window_bounds = array<i64: 1, 1, 8>}, {pipeline_mode = #tpu.pipeline_mode<synchronous>, transform_indices = @transform_2, window_bounds = array<i64: 32, 96>}, {pipeline_mode = #tpu.pipeline_mode<synchronous>, transform_indices = @transform_3, window_bounds = array<i64: 1, 96>}, {pipeline_mode = #tpu.pipeline_mode<synchronous>, transform_indices = @transform_4, window_bounds = array<i64: 32, 32>}, {pipeline_mode = #tpu.pipeline_mode<synchronous>, transform_indices = @transform_5, window_bounds = array<i64: 1, 32>}, {pipeline_mode = #tpu.pipeline_mode<synchronous>, transform_indices = @transform_6, window_bounds = array<i64: 1, 32>}, {pipeline_mode = #tpu.pipeline_mode<synchronous>, transform_indices = @transform_7, window_bounds = array<i64: 1, 32>}, {pipeline_mode = #tpu.pipeline_mode<synchronous>, transform_indices = @transform_8, window_bounds = array<i64: 32, 128>}, {pipeline_mode = #tpu.pipeline_mode<synchronous>, transform_indices = @transform_9, window_bounds = array<i64: 1, 128>}, {pipeline_mode = #tpu.pipeline_mode<synchronous>, transform_indices = @transform_10, window_bounds = array<i64: 128, 32>}, {pipeline_mode = #tpu.pipeline_mode<synchronous>, transform_indices = @transform_11, window_bounds = array<i64: 1, 32>}, {pipeline_mode = #tpu.pipeline_mode<synchronous>, transform_indices = @transform_12, window_bounds = array<i64: 1, 32>}, {pipeline_mode = #tpu.pipeline_mode<synchronous>, transform_indices = @transform_13, window_bounds = array<i64: 1, 32>}, {pipeline_mode = #tpu.pipeline_mode<synchronous>, transform_indices = @transform_14, window_bounds = array<i64: 32, 32>}, {pipeline_mode = #tpu.pipeline_mode<synchronous>, transform_indices = @transform_15, window_bounds = array<i64: 1, 32>}, {pipeline_mode = #tpu.pipeline_mode<synchronous>, transform_indices = @transform_16, window_bounds = array<i64: 1, 32>}, {pipeline_mode = #tpu.pipeline_mode<synchronous>, transform_indices = @transform_17, window_bounds = array<i64: 1, 32>}, {pipeline_mode = #tpu.pipeline_mode<synchronous>, transform_indices = @transform_18, window_bounds = array<i64: 32, 128>}, {pipeline_mode = #tpu.pipeline_mode<synchronous>, transform_indices = @transform_19, window_bounds = array<i64: 1, 128>}, {transform_indices = @transform_20, window_bounds = array<i64: 1, 8, 32>}, {transform_indices = @transform_21, window_bounds = array<i64: 1, 8, 128>}]} {
    %c0 = arith.constant 0 : index
    %c0_0 = arith.constant 0 : index
    %c0_1 = arith.constant 0 : index
    %0 = vector.load %arg1[%c0, %c0_0, %c0_1] : memref<1x8x32xf32, #tpu.memory_space<vmem>>, vector<1x8x32xf32>
    %1 = vector.shape_cast %0 : vector<1x8x32xf32> to vector<8x32xf32>
    %c0_2 = arith.constant 0 : index
    %c0_3 = arith.constant 0 : index
    %c0_4 = arith.constant 0 : index
    %2 = vector.load %arg2[%c0_2, %c0_3, %c0_4] : memref<1x1x8xf32, #tpu.memory_space<vmem>>, vector<1x1x8xf32>
    %3 = vector.shape_cast %2 : vector<1x1x8xf32> to vector<1x8xf32>
    %c0_5 = arith.constant 0 : index
    %c0_6 = arith.constant 0 : index
    %4 = vector.load %arg4[%c0_5, %c0_6] : memref<1x96xf32, #tpu.memory_space<vmem>>, vector<1x96xf32>
    %c0_7 = arith.constant 0 : index
    %c0_8 = arith.constant 0 : index
    %5 = vector.load %arg6[%c0_7, %c0_8] : memref<1x32xf32, #tpu.memory_space<vmem>>, vector<1x32xf32>
    %c0_9 = arith.constant 0 : index
    %c0_10 = arith.constant 0 : index
    %6 = vector.load %arg7[%c0_9, %c0_10] : memref<1x32xf32, #tpu.memory_space<vmem>>, vector<1x32xf32>
    %c0_11 = arith.constant 0 : index
    %c0_12 = arith.constant 0 : index
    %7 = vector.load %arg8[%c0_11, %c0_12] : memref<1x32xf32, #tpu.memory_space<vmem>>, vector<1x32xf32>
    %c0_13 = arith.constant 0 : index
    %c0_14 = arith.constant 0 : index
    %8 = vector.load %arg10[%c0_13, %c0_14] : memref<1x128xf32, #tpu.memory_space<vmem>>, vector<1x128xf32>
    %c0_15 = arith.constant 0 : index
    %c0_16 = arith.constant 0 : index
    %9 = vector.load %arg12[%c0_15, %c0_16] : memref<1x32xf32, #tpu.memory_space<vmem>>, vector<1x32xf32>
    %c0_17 = arith.constant 0 : index
    %c0_18 = arith.constant 0 : index
    %10 = vector.load %arg13[%c0_17, %c0_18] : memref<1x32xf32, #tpu.memory_space<vmem>>, vector<1x32xf32>
    %c0_19 = arith.constant 0 : index
    %c0_20 = arith.constant 0 : index
    %11 = vector.load %arg14[%c0_19, %c0_20] : memref<1x32xf32, #tpu.memory_space<vmem>>, vector<1x32xf32>
    %c0_21 = arith.constant 0 : index
    %c0_22 = arith.constant 0 : index
    %12 = vector.load %arg16[%c0_21, %c0_22] : memref<1x32xf32, #tpu.memory_space<vmem>>, vector<1x32xf32>
    %c0_23 = arith.constant 0 : index
    %c0_24 = arith.constant 0 : index
    %13 = vector.load %arg17[%c0_23, %c0_24] : memref<1x32xf32, #tpu.memory_space<vmem>>, vector<1x32xf32>
    %c0_25 = arith.constant 0 : index
    %c0_26 = arith.constant 0 : index
    %14 = vector.load %arg18[%c0_25, %c0_26] : memref<1x32xf32, #tpu.memory_space<vmem>>, vector<1x32xf32>
    %c0_27 = arith.constant 0 : index
    %c0_28 = arith.constant 0 : index
    %15 = vector.load %arg20[%c0_27, %c0_28] : memref<1x128xf32, #tpu.memory_space<vmem>>, vector<1x128xf32>
    %c0_29 = arith.constant 0 : index
    %c0_30 = arith.constant 0 : index
    %16 = vector.load %arg3[%c0_29, %c0_30] : memref<32x96xf32, #tpu.memory_space<vmem>>, vector<32x96xf32>
    %cst = arith.constant dense<0.000000e+00> : vector<8x96xf32>
    %17 = tpu.matmul %1, %16, %cst {dimension_numbers = #tpu.dot_dimension_numbers<[1], [0], [0], [1], [0, 0, 1, 1], [], []>} : vector<8x32xf32>, vector<32x96xf32>, vector<8x96xf32> -> vector<8x96xf32>
    %18 = vector.broadcast %4 : vector<1x96xf32> to vector<8x96xf32>
    %19 = arith.addf %17, %18 : vector<8x96xf32>
    %20 = vector.extract_strided_slice %19 {offsets = [0, 0], sizes = [8, 32], strides = [1, 1]} : vector<8x96xf32> to vector<8x32xf32>
    %21 = vector.extract_strided_slice %19 {offsets = [0, 32], sizes = [8, 32], strides = [1, 1]} : vector<8x96xf32> to vector<8x32xf32>
    %22 = vector.extract_strided_slice %19 {offsets = [0, 64], sizes = [8, 32], strides = [1, 1]} : vector<8x96xf32> to vector<8x32xf32>
    %23 = vector.extract_strided_slice %20 {offsets = [0, 0], sizes = [8, 8], strides = [1, 1]} : vector<8x32xf32> to vector<8x8xf32>
    %24 = vector.extract_strided_slice %21 {offsets = [0, 0], sizes = [8, 8], strides = [1, 1]} : vector<8x32xf32> to vector<8x8xf32>
    %25 = vector.extract_strided_slice %22 {offsets = [0, 0], sizes = [8, 8], strides = [1, 1]} : vector<8x32xf32> to vector<8x8xf32>
    %cst_31 = arith.constant dense<0.000000e+00> : vector<8x8xf32>
    %26 = tpu.matmul %23, %24, %cst_31 {dimension_numbers = #tpu.dot_dimension_numbers<[1], [1], [0], [0], [0, 0, 1, 0], [], []>} : vector<8x8xf32>, vector<8x8xf32>, vector<8x8xf32> -> vector<8x8xf32>
    %cst_32 = arith.constant 0.353553385 : f32
    %27 = vector.broadcast %cst_32 : f32 to vector<8x8xf32>
    %28 = arith.mulf %26, %27 : vector<8x8xf32>
    %29 = vector.broadcast %3 : vector<1x8xf32> to vector<8x8xf32>
    %30 = arith.addf %28, %29 : vector<8x8xf32>
    %cst_33 = arith.constant dense<0xFF800000> : vector<8xf32>
    %31 = vector.multi_reduction <maximumf>, %30, %cst_33 [1] : vector<8x8xf32> to vector<8xf32>
    %32 = vector.shape_cast %31 : vector<8xf32> to vector<8x1xf32>
    %33 = vector.broadcast %32 : vector<8x1xf32> to vector<8x8xf32>
    %34 = arith.subf %30, %33 : vector<8x8xf32>
    %35 = math.exp %34 : vector<8x8xf32>
    %cst_34 = arith.constant dense<0.000000e+00> : vector<8xf32>
    %36 = vector.multi_reduction <add>, %35, %cst_34 [1] : vector<8x8xf32> to vector<8xf32>
    %37 = vector.shape_cast %36 : vector<8xf32> to vector<8x1xf32>
    %38 = tpu.reciprocal %37 {approx = true} : vector<8x1xf32> -> vector<8x1xf32>
    %39 = vector.broadcast %38 : vector<8x1xf32> to vector<8x8xf32>
    %40 = arith.mulf %35, %39 : vector<8x8xf32>
    %cst_35 = arith.constant dense<0.000000e+00> : vector<8x8xf32>
    %41 = tpu.matmul %40, %25, %cst_35 {dimension_numbers = #tpu.dot_dimension_numbers<[1], [0], [0], [1], [0, 0, 1, 1], [], []>} : vector<8x8xf32>, vector<8x8xf32>, vector<8x8xf32> -> vector<8x8xf32>
    %42 = vector.extract_strided_slice %20 {offsets = [0, 8], sizes = [8, 8], strides = [1, 1]} : vector<8x32xf32> to vector<8x8xf32>
    %43 = vector.extract_strided_slice %21 {offsets = [0, 8], sizes = [8, 8], strides = [1, 1]} : vector<8x32xf32> to vector<8x8xf32>
    %44 = vector.extract_strided_slice %22 {offsets = [0, 8], sizes = [8, 8], strides = [1, 1]} : vector<8x32xf32> to vector<8x8xf32>
    %cst_36 = arith.constant dense<0.000000e+00> : vector<8x8xf32>
    %45 = tpu.matmul %42, %43, %cst_36 {dimension_numbers = #tpu.dot_dimension_numbers<[1], [1], [0], [0], [0, 0, 1, 0], [], []>} : vector<8x8xf32>, vector<8x8xf32>, vector<8x8xf32> -> vector<8x8xf32>
    %cst_37 = arith.constant 0.353553385 : f32
    %46 = vector.broadcast %cst_37 : f32 to vector<8x8xf32>
    %47 = arith.mulf %45, %46 : vector<8x8xf32>
    %48 = vector.broadcast %3 : vector<1x8xf32> to vector<8x8xf32>
    %49 = arith.addf %47, %48 : vector<8x8xf32>
    %cst_38 = arith.constant dense<0xFF800000> : vector<8xf32>
    %50 = vector.multi_reduction <maximumf>, %49, %cst_38 [1] : vector<8x8xf32> to vector<8xf32>
    %51 = vector.shape_cast %50 : vector<8xf32> to vector<8x1xf32>
    %52 = vector.broadcast %51 : vector<8x1xf32> to vector<8x8xf32>
    %53 = arith.subf %49, %52 : vector<8x8xf32>
    %54 = math.exp %53 : vector<8x8xf32>
    %cst_39 = arith.constant dense<0.000000e+00> : vector<8xf32>
    %55 = vector.multi_reduction <add>, %54, %cst_39 [1] : vector<8x8xf32> to vector<8xf32>
    %56 = vector.shape_cast %55 : vector<8xf32> to vector<8x1xf32>
    %57 = tpu.reciprocal %56 {approx = true} : vector<8x1xf32> -> vector<8x1xf32>
    %58 = vector.broadcast %57 : vector<8x1xf32> to vector<8x8xf32>
    %59 = arith.mulf %54, %58 : vector<8x8xf32>
    %cst_40 = arith.constant dense<0.000000e+00> : vector<8x8xf32>
    %60 = tpu.matmul %59, %44, %cst_40 {dimension_numbers = #tpu.dot_dimension_numbers<[1], [0], [0], [1], [0, 0, 1, 1], [], []>} : vector<8x8xf32>, vector<8x8xf32>, vector<8x8xf32> -> vector<8x8xf32>
    %61 = vector.extract_strided_slice %20 {offsets = [0, 16], sizes = [8, 8], strides = [1, 1]} : vector<8x32xf32> to vector<8x8xf32>
    %62 = vector.extract_strided_slice %21 {offsets = [0, 16], sizes = [8, 8], strides = [1, 1]} : vector<8x32xf32> to vector<8x8xf32>
    %63 = vector.extract_strided_slice %22 {offsets = [0, 16], sizes = [8, 8], strides = [1, 1]} : vector<8x32xf32> to vector<8x8xf32>
    %cst_41 = arith.constant dense<0.000000e+00> : vector<8x8xf32>
    %64 = tpu.matmul %61, %62, %cst_41 {dimension_numbers = #tpu.dot_dimension_numbers<[1], [1], [0], [0], [0, 0, 1, 0], [], []>} : vector<8x8xf32>, vector<8x8xf32>, vector<8x8xf32> -> vector<8x8xf32>
    %cst_42 = arith.constant 0.353553385 : f32
    %65 = vector.broadcast %cst_42 : f32 to vector<8x8xf32>
    %66 = arith.mulf %64, %65 : vector<8x8xf32>
    %67 = vector.broadcast %3 : vector<1x8xf32> to vector<8x8xf32>
    %68 = arith.addf %66, %67 : vector<8x8xf32>
    %cst_43 = arith.constant dense<0xFF800000> : vector<8xf32>
    %69 = vector.multi_reduction <maximumf>, %68, %cst_43 [1] : vector<8x8xf32> to vector<8xf32>
    %70 = vector.shape_cast %69 : vector<8xf32> to vector<8x1xf32>
    %71 = vector.broadcast %70 : vector<8x1xf32> to vector<8x8xf32>
    %72 = arith.subf %68, %71 : vector<8x8xf32>
    %73 = math.exp %72 : vector<8x8xf32>
    %cst_44 = arith.constant dense<0.000000e+00> : vector<8xf32>
    %74 = vector.multi_reduction <add>, %73, %cst_44 [1] : vector<8x8xf32> to vector<8xf32>
    %75 = vector.shape_cast %74 : vector<8xf32> to vector<8x1xf32>
    %76 = tpu.reciprocal %75 {approx = true} : vector<8x1xf32> -> vector<8x1xf32>
    %77 = vector.broadcast %76 : vector<8x1xf32> to vector<8x8xf32>
    %78 = arith.mulf %73, %77 : vector<8x8xf32>
    %cst_45 = arith.constant dense<0.000000e+00> : vector<8x8xf32>
    %79 = tpu.matmul %78, %63, %cst_45 {dimension_numbers = #tpu.dot_dimension_numbers<[1], [0], [0], [1], [0, 0, 1, 1], [], []>} : vector<8x8xf32>, vector<8x8xf32>, vector<8x8xf32> -> vector<8x8xf32>
    %80 = vector.extract_strided_slice %20 {offsets = [0, 24], sizes = [8, 8], strides = [1, 1]} : vector<8x32xf32> to vector<8x8xf32>
    %81 = vector.extract_strided_slice %21 {offsets = [0, 24], sizes = [8, 8], strides = [1, 1]} : vector<8x32xf32> to vector<8x8xf32>
    %82 = vector.extract_strided_slice %22 {offsets = [0, 24], sizes = [8, 8], strides = [1, 1]} : vector<8x32xf32> to vector<8x8xf32>
    %cst_46 = arith.constant dense<0.000000e+00> : vector<8x8xf32>
    %83 = tpu.matmul %80, %81, %cst_46 {dimension_numbers = #tpu.dot_dimension_numbers<[1], [1], [0], [0], [0, 0, 1, 0], [], []>} : vector<8x8xf32>, vector<8x8xf32>, vector<8x8xf32> -> vector<8x8xf32>
    %cst_47 = arith.constant 0.353553385 : f32
    %84 = vector.broadcast %cst_47 : f32 to vector<8x8xf32>
    %85 = arith.mulf %83, %84 : vector<8x8xf32>
    %86 = vector.broadcast %3 : vector<1x8xf32> to vector<8x8xf32>
    %87 = arith.addf %85, %86 : vector<8x8xf32>
    %cst_48 = arith.constant dense<0xFF800000> : vector<8xf32>
    %88 = vector.multi_reduction <maximumf>, %87, %cst_48 [1] : vector<8x8xf32> to vector<8xf32>
    %89 = vector.shape_cast %88 : vector<8xf32> to vector<8x1xf32>
    %90 = vector.broadcast %89 : vector<8x1xf32> to vector<8x8xf32>
    %91 = arith.subf %87, %90 : vector<8x8xf32>
    %92 = math.exp %91 : vector<8x8xf32>
    %cst_49 = arith.constant dense<0.000000e+00> : vector<8xf32>
    %93 = vector.multi_reduction <add>, %92, %cst_49 [1] : vector<8x8xf32> to vector<8xf32>
    %94 = vector.shape_cast %93 : vector<8xf32> to vector<8x1xf32>
    %95 = tpu.reciprocal %94 {approx = true} : vector<8x1xf32> -> vector<8x1xf32>
    %96 = vector.broadcast %95 : vector<8x1xf32> to vector<8x8xf32>
    %97 = arith.mulf %92, %96 : vector<8x8xf32>
    %cst_50 = arith.constant dense<0.000000e+00> : vector<8x8xf32>
    %98 = tpu.matmul %97, %82, %cst_50 {dimension_numbers = #tpu.dot_dimension_numbers<[1], [0], [0], [1], [0, 0, 1, 1], [], []>} : vector<8x8xf32>, vector<8x8xf32>, vector<8x8xf32> -> vector<8x8xf32>
    %99 = tpu.concatenate %41, %60, %79, %98 in 1 : vector<8x8xf32>, vector<8x8xf32>, vector<8x8xf32>, vector<8x8xf32> -> vector<8x32xf32>
    %c0_51 = arith.constant 0 : index
    %c0_52 = arith.constant 0 : index
    %100 = vector.load %arg5[%c0_51, %c0_52] : memref<32x32xf32, #tpu.memory_space<vmem>>, vector<32x32xf32>
    %cst_53 = arith.constant dense<0.000000e+00> : vector<8x32xf32>
    %101 = tpu.matmul %99, %100, %cst_53 {dimension_numbers = #tpu.dot_dimension_numbers<[1], [0], [0], [1], [0, 0, 1, 1], [], []>} : vector<8x32xf32>, vector<32x32xf32>, vector<8x32xf32> -> vector<8x32xf32>
    %102 = vector.broadcast %5 : vector<1x32xf32> to vector<8x32xf32>
    %103 = arith.addf %101, %102 : vector<8x32xf32>
    %104 = arith.addf %103, %1 : vector<8x32xf32>
    %cst_54 = arith.constant dense<0.000000e+00> : vector<8xf32>
    %105 = vector.multi_reduction <add>, %104, %cst_54 [1] : vector<8x32xf32> to vector<8xf32>
    %106 = vector.shape_cast %105 : vector<8xf32> to vector<8x1xf32>
    %cst_55 = arith.constant 3.200000e+01 : f32
    %107 = vector.broadcast %cst_55 : f32 to vector<8x1xf32>
    %108 = arith.divf %106, %107 : vector<8x1xf32>
    %109 = vector.broadcast %108 : vector<8x1xf32> to vector<8x32xf32>
    %110 = arith.subf %104, %109 : vector<8x32xf32>
    %111 = arith.mulf %110, %110 : vector<8x32xf32>
    %cst_56 = arith.constant dense<0.000000e+00> : vector<8xf32>
    %112 = vector.multi_reduction <add>, %111, %cst_56 [1] : vector<8x32xf32> to vector<8xf32>
    %113 = vector.shape_cast %112 : vector<8xf32> to vector<8x1xf32>
    %cst_57 = arith.constant 3.200000e+01 : f32
    %114 = vector.broadcast %cst_57 : f32 to vector<8x1xf32>
    %115 = arith.divf %113, %114 : vector<8x1xf32>
    %116 = vector.broadcast %108 : vector<8x1xf32> to vector<8x32xf32>
    %117 = arith.subf %104, %116 : vector<8x32xf32>
    %cst_58 = arith.constant 9.99999996E-13 : f32
    %118 = vector.broadcast %cst_58 : f32 to vector<8x1xf32>
    %119 = arith.addf %115, %118 : vector<8x1xf32>
    %120 = math.rsqrt %119 : vector<8x1xf32>
    %121 = vector.broadcast %120 : vector<8x1xf32> to vector<8x32xf32>
    %122 = arith.mulf %117, %121 : vector<8x32xf32>
    %123 = vector.broadcast %6 : vector<1x32xf32> to vector<8x32xf32>
    %124 = arith.mulf %122, %123 : vector<8x32xf32>
    %125 = vector.broadcast %7 : vector<1x32xf32> to vector<8x32xf32>
    %126 = arith.addf %124, %125 : vector<8x32xf32>
    %c0_59 = arith.constant 0 : index
    %c0_60 = arith.constant 0 : index
    %127 = vector.load %arg9[%c0_59, %c0_60] : memref<32x128xf32, #tpu.memory_space<vmem>>, vector<32x128xf32>
    %cst_61 = arith.constant dense<0.000000e+00> : vector<8x128xf32>
    %128 = tpu.matmul %126, %127, %cst_61 {dimension_numbers = #tpu.dot_dimension_numbers<[1], [0], [0], [1], [0, 0, 1, 1], [], []>} : vector<8x32xf32>, vector<32x128xf32>, vector<8x128xf32> -> vector<8x128xf32>
    %129 = vector.broadcast %8 : vector<1x128xf32> to vector<8x128xf32>
    %130 = arith.addf %128, %129 : vector<8x128xf32>
    %cst_62 = arith.constant 5.000000e-01 : f32
    %131 = vector.broadcast %cst_62 : f32 to vector<8x128xf32>
    %132 = arith.mulf %131, %130 : vector<8x128xf32>
    %cst_63 = arith.constant 0.707106769 : f32
    %133 = vector.broadcast %cst_63 : f32 to vector<8x128xf32>
    %134 = arith.mulf %130, %133 : vector<8x128xf32>
    %135 = math.erf %134 : vector<8x128xf32>
    %cst_64 = arith.constant 1.000000e+00 : f32
    %136 = vector.broadcast %cst_64 : f32 to vector<8x128xf32>
    %137 = arith.addf %136, %135 : vector<8x128xf32>
    %138 = arith.mulf %132, %137 : vector<8x128xf32>
    %c0_65 = arith.constant 0 : index
    %c0_66 = arith.constant 0 : index
    %139 = vector.load %arg11[%c0_65, %c0_66] : memref<128x32xf32, #tpu.memory_space<vmem>>, vector<128x32xf32>
    %cst_67 = arith.constant dense<0.000000e+00> : vector<8x32xf32>
    %140 = tpu.matmul %138, %139, %cst_67 {dimension_numbers = #tpu.dot_dimension_numbers<[1], [0], [0], [1], [0, 0, 1, 1], [], []>} : vector<8x128xf32>, vector<128x32xf32>, vector<8x32xf32> -> vector<8x32xf32>
    %141 = vector.broadcast %9 : vector<1x32xf32> to vector<8x32xf32>
    %142 = arith.addf %140, %141 : vector<8x32xf32>
    %143 = arith.addf %142, %126 : vector<8x32xf32>
    %cst_68 = arith.constant dense<0.000000e+00> : vector<8xf32>
    %144 = vector.multi_reduction <add>, %143, %cst_68 [1] : vector<8x32xf32> to vector<8xf32>
    %145 = vector.shape_cast %144 : vector<8xf32> to vector<8x1xf32>
    %cst_69 = arith.constant 3.200000e+01 : f32
    %146 = vector.broadcast %cst_69 : f32 to vector<8x1xf32>
    %147 = arith.divf %145, %146 : vector<8x1xf32>
    %148 = vector.broadcast %147 : vector<8x1xf32> to vector<8x32xf32>
    %149 = arith.subf %143, %148 : vector<8x32xf32>
    %150 = arith.mulf %149, %149 : vector<8x32xf32>
    %cst_70 = arith.constant dense<0.000000e+00> : vector<8xf32>
    %151 = vector.multi_reduction <add>, %150, %cst_70 [1] : vector<8x32xf32> to vector<8xf32>
    %152 = vector.shape_cast %151 : vector<8xf32> to vector<8x1xf32>
    %cst_71 = arith.constant 3.200000e+01 : f32
    %153 = vector.broadcast %cst_71 : f32 to vector<8x1xf32>
    %154 = arith.divf %152, %153 : vector<8x1xf32>
    %155 = vector.broadcast %147 : vector<8x1xf32> to vector<8x32xf32>
    %156 = arith.subf %143, %155 : vector<8x32xf32>
    %cst_72 = arith.constant 9.99999996E-13 : f32
    %157 = vector.broadcast %cst_72 : f32 to vector<8x1xf32>
    %158 = arith.addf %154, %157 : vector<8x1xf32>
    %159 = math.rsqrt %158 : vector<8x1xf32>
    %160 = vector.broadcast %159 : vector<8x1xf32> to vector<8x32xf32>
    %161 = arith.mulf %156, %160 : vector<8x32xf32>
    %162 = vector.broadcast %10 : vector<1x32xf32> to vector<8x32xf32>
    %163 = arith.mulf %161, %162 : vector<8x32xf32>
    %164 = vector.broadcast %11 : vector<1x32xf32> to vector<8x32xf32>
    %165 = arith.addf %163, %164 : vector<8x32xf32>
    %c0_73 = arith.constant 0 : index
    %c0_74 = arith.constant 0 : index
    %c0_75 = arith.constant 0 : index
    %166 = vector.load %arg21[%c0_73, %c0_74, %c0_75] : memref<1x8x32xf32, #tpu.memory_space<vmem>>, vector<1x8x32xf32>
    %167 = vector.shape_cast %166 : vector<1x8x32xf32> to vector<8x32xf32>
    %168 = vector.shape_cast %165 : vector<8x32xf32> to vector<1x8x32xf32>
    tpu.vector_store %arg21[%c0_73, %c0_74, %c0_75], %168 {strides = array<i32>} : memref<1x8x32xf32, #tpu.memory_space<vmem>>, vector<1x8x32xf32>,
    %c0_76 = arith.constant 0 : index
    %c0_77 = arith.constant 0 : index
    %169 = vector.load %arg15[%c0_76, %c0_77] : memref<32x32xf32, #tpu.memory_space<vmem>>, vector<32x32xf32>
    %cst_78 = arith.constant dense<0.000000e+00> : vector<8x32xf32>
    %170 = tpu.matmul %165, %169, %cst_78 {dimension_numbers = #tpu.dot_dimension_numbers<[1], [0], [0], [1], [0, 0, 1, 1], [], []>} : vector<8x32xf32>, vector<32x32xf32>, vector<8x32xf32> -> vector<8x32xf32>
    %171 = vector.broadcast %12 : vector<1x32xf32> to vector<8x32xf32>
    %172 = arith.addf %170, %171 : vector<8x32xf32>
    %cst_79 = arith.constant 5.000000e-01 : f32
    %173 = vector.broadcast %cst_79 : f32 to vector<8x32xf32>
    %174 = arith.mulf %173, %172 : vector<8x32xf32>
    %cst_80 = arith.constant 0.707106769 : f32
    %175 = vector.broadcast %cst_80 : f32 to vector<8x32xf32>
    %176 = arith.mulf %172, %175 : vector<8x32xf32>
    %177 = math.erf %176 : vector<8x32xf32>
    %cst_81 = arith.constant 1.000000e+00 : f32
    %178 = vector.broadcast %cst_81 : f32 to vector<8x32xf32>
    %179 = arith.addf %178, %177 : vector<8x32xf32>
    %180 = arith.mulf %174, %179 : vector<8x32xf32>
    %cst_82 = arith.constant dense<0.000000e+00> : vector<8xf32>
    %181 = vector.multi_reduction <add>, %180, %cst_82 [1] : vector<8x32xf32> to vector<8xf32>
    %182 = vector.shape_cast %181 : vector<8xf32> to vector<8x1xf32>
    %cst_83 = arith.constant 3.200000e+01 : f32
    %183 = vector.broadcast %cst_83 : f32 to vector<8x1xf32>
    %184 = arith.divf %182, %183 : vector<8x1xf32>
    %185 = vector.broadcast %184 : vector<8x1xf32> to vector<8x32xf32>
    %186 = arith.subf %180, %185 : vector<8x32xf32>
    %187 = arith.mulf %186, %186 : vector<8x32xf32>
    %cst_84 = arith.constant dense<0.000000e+00> : vector<8xf32>
    %188 = vector.multi_reduction <add>, %187, %cst_84 [1] : vector<8x32xf32> to vector<8xf32>
    %189 = vector.shape_cast %188 : vector<8xf32> to vector<8x1xf32>
    %cst_85 = arith.constant 3.200000e+01 : f32
    %190 = vector.broadcast %cst_85 : f32 to vector<8x1xf32>
    %191 = arith.divf %189, %190 : vector<8x1xf32>
    %192 = vector.broadcast %184 : vector<8x1xf32> to vector<8x32xf32>
    %193 = arith.subf %180, %192 : vector<8x32xf32>
    %cst_86 = arith.constant 9.99999996E-13 : f32
    %194 = vector.broadcast %cst_86 : f32 to vector<8x1xf32>
    %195 = arith.addf %191, %194 : vector<8x1xf32>
    %196 = math.rsqrt %195 : vector<8x1xf32>
    %197 = vector.broadcast %196 : vector<8x1xf32> to vector<8x32xf32>
    %198 = arith.mulf %193, %197 : vector<8x32xf32>
    %199 = vector.broadcast %13 : vector<1x32xf32> to vector<8x32xf32>
    %200 = arith.mulf %198, %199 : vector<8x32xf32>
    %201 = vector.broadcast %14 : vector<1x32xf32> to vector<8x32xf32>
    %202 = arith.addf %200, %201 : vector<8x32xf32>
    %c0_87 = arith.constant 0 : index
    %c0_88 = arith.constant 0 : index
    %203 = vector.load %arg19[%c0_87, %c0_88] : memref<32x128xf32, #tpu.memory_space<vmem>>, vector<32x128xf32>
    %cst_89 = arith.constant dense<0.000000e+00> : vector<8x128xf32>
    %204 = tpu.matmul %202, %203, %cst_89 {dimension_numbers = #tpu.dot_dimension_numbers<[1], [0], [0], [1], [0, 0, 1, 1], [], []>} : vector<8x32xf32>, vector<32x128xf32>, vector<8x128xf32> -> vector<8x128xf32>
    %205 = vector.broadcast %15 : vector<1x128xf32> to vector<8x128xf32>
    %206 = arith.addf %204, %205 : vector<8x128xf32>
    %c0_90 = arith.constant 0 : index
    %c0_91 = arith.constant 0 : index
    %c0_92 = arith.constant 0 : index
    %207 = vector.load %arg22[%c0_90, %c0_91, %c0_92] : memref<1x8x128xf32, #tpu.memory_space<vmem>>, vector<1x8x128xf32>
    %208 = vector.shape_cast %207 : vector<1x8x128xf32> to vector<8x128xf32>
    %209 = vector.shape_cast %206 : vector<8x128xf32> to vector<1x8x128xf32>
    tpu.vector_store %arg22[%c0_90, %c0_91, %c0_92], %209 {strides = array<i32>} : memref<1x8x128xf32, #tpu.memory_space<vmem>>, vector<1x8x128xf32>,
    return
  }
  func.func @transform_0(%arg0: i32) -> (i32, i32, i32) {
    %c0_i32 = arith.constant 0 : i32
    %c0_i32_0 = arith.constant 0 : i32
    %c0_i32_1 = arith.constant 0 : i32
    return %arg0, %c0_i32, %c0_i32_0 : i32, i32, i32
  }
  func.func @transform_1(%arg0: i32) -> (i32, i32, i32) {
    %c0_i32 = arith.constant 0 : i32
    %c0_i32_0 = arith.constant 0 : i32
    %c0_i32_1 = arith.constant 0 : i32
    return %arg0, %c0_i32, %c0_i32_0 : i32, i32, i32
  }
  func.func @transform_2(%arg0: i32) -> (i32, i32) {
    %c0_i32 = arith.constant 0 : i32
    %c0_i32_0 = arith.constant 0 : i32
    %c0_i32_1 = arith.constant 0 : i32
    return %c0_i32, %c0_i32_0 : i32, i32
  }
  func.func @transform_3(%arg0: i32) -> (i32, i32) {
    %c0_i32 = arith.constant 0 : i32
    %c0_i32_0 = arith.constant 0 : i32
    %c0_i32_1 = arith.constant 0 : i32
    return %c0_i32, %c0_i32_0 : i32, i32
  }
  func.func @transform_4(%arg0: i32) -> (i32, i32) {
    %c0_i32 = arith.constant 0 : i32
    %c0_i32_0 = arith.constant 0 : i32
    %c0_i32_1 = arith.constant 0 : i32
    return %c0_i32, %c0_i32_0 : i32, i32
  }
  func.func @transform_5(%arg0: i32) -> (i32, i32) {
    %c0_i32 = arith.constant 0 : i32
    %c0_i32_0 = arith.constant 0 : i32
    %c0_i32_1 = arith.constant 0 : i32
    return %c0_i32, %c0_i32_0 : i32, i32
  }
  func.func @transform_6(%arg0: i32) -> (i32, i32) {
    %c0_i32 = arith.constant 0 : i32
    %c0_i32_0 = arith.constant 0 : i32
    %c0_i32_1 = arith.constant 0 : i32
    return %c0_i32, %c0_i32_0 : i32, i32
  }
  func.func @transform_7(%arg0: i32) -> (i32, i32) {
    %c0_i32 = arith.constant 0 : i32
    %c0_i32_0 = arith.constant 0 : i32
    %c0_i32_1 = arith.constant 0 : i32
    return %c0_i32, %c0_i32_0 : i32, i32
  }
  func.func @transform_8(%arg0: i32) -> (i32, i32) {
    %c0_i32 = arith.constant 0 : i32
    %c0_i32_0 = arith.constant 0 : i32
    %c0_i32_1 = arith.constant 0 : i32
    return %c0_i32, %c0_i32_0 : i32, i32
  }
  func.func @transform_9(%arg0: i32) -> (i32, i32) {
    %c0_i32 = arith.constant 0 : i32
    %c0_i32_0 = arith.constant 0 : i32
    %c0_i32_1 = arith.constant 0 : i32
    return %c0_i32, %c0_i32_0 : i32, i32
  }
  func.func @transform_10(%arg0: i32) -> (i32, i32) {
    %c0_i32 = arith.constant 0 : i32
    %c0_i32_0 = arith.constant 0 : i32
    %c0_i32_1 = arith.constant 0 : i32
    return %c0_i32, %c0_i32_0 : i32, i32
  }
  func.func @transform_11(%arg0: i32) -> (i32, i32) {
    %c0_i32 = arith.constant 0 : i32
    %c0_i32_0 = arith.constant 0 : i32
    %c0_i32_1 = arith.constant 0 : i32
    return %c0_i32, %c0_i32_0 : i32, i32
  }
  func.func @transform_12(%arg0: i32) -> (i32, i32) {
    %c0_i32 = arith.constant 0 : i32
    %c0_i32_0 = arith.constant 0 : i32
    %c0_i32_1 = arith.constant 0 : i32
    return %c0_i32, %c0_i32_0 : i32, i32
  }
  func.func @transform_13(%arg0: i32) -> (i32, i32) {
    %c0_i32 = arith.constant 0 : i32
    %c0_i32_0 = arith.constant 0 : i32
    %c0_i32_1 = arith.constant 0 : i32
    return %c0_i32, %c0_i32_0 : i32, i32
  }
  func.func @transform_14(%arg0: i32) -> (i32, i32) {
    %c0_i32 = arith.constant 0 : i32
    %c0_i32_0 = arith.constant 0 : i32
    %c0_i32_1 = arith.constant 0 : i32
    return %c0_i32, %c0_i32_0 : i32, i32
  }
  func.func @transform_15(%arg0: i32) -> (i32, i32) {
    %c0_i32 = arith.constant 0 : i32
    %c0_i32_0 = arith.constant 0 : i32
    %c0_i32_1 = arith.constant 0 : i32
    return %c0_i32, %c0_i32_0 : i32, i32
  }
  func.func @transform_16(%arg0: i32) -> (i32, i32) {
    %c0_i32 = arith.constant 0 : i32
    %c0_i32_0 = arith.constant 0 : i32
    %c0_i32_1 = arith.constant 0 : i32
    return %c0_i32, %c0_i32_0 : i32, i32
  }
  func.func @transform_17(%arg0: i32) -> (i32, i32) {
    %c0_i32 = arith.constant 0 : i32
    %c0_i32_0 = arith.constant 0 : i32
    %c0_i32_1 = arith.constant 0 : i32
    return %c0_i32, %c0_i32_0 : i32, i32
  }
  func.func @transform_18(%arg0: i32) -> (i32, i32) {
    %c0_i32 = arith.constant 0 : i32
    %c0_i32_0 = arith.constant 0 : i32
    %c0_i32_1 = arith.constant 0 : i32
    return %c0_i32, %c0_i32_0 : i32, i32
  }
  func.func @transform_19(%arg0: i32) -> (i32, i32) {
    %c0_i32 = arith.constant 0 : i32
    %c0_i32_0 = arith.constant 0 : i32
    %c0_i32_1 = arith.constant 0 : i32
    return %c0_i32, %c0_i32_0 : i32, i32
  }
  func.func @transform_20(%arg0: i32) -> (i32, i32, i32) {
    %c0_i32 = arith.constant 0 : i32
    %c0_i32_0 = arith.constant 0 : i32
    %c0_i32_1 = arith.constant 0 : i32
    return %arg0, %c0_i32, %c0_i32_0 : i32, i32, i32
  }
  func.func @transform_21(%arg0: i32) -> (i32, i32, i32) {
    %c0_i32 = arith.constant 0 : i32
    %c0_i32_0 = arith.constant 0 : i32
    %c0_i32_1 = arith.constant 0 : i32
    return %arg0, %c0_i32, %c0_i32_0 : i32, i32, i32
  }
}

</mosaic_0001>

<llo_original>
// kernel: tpu_custom_call.1
$region0: #{tpu_custom_call.1}
  #allocation0 [shape = 'u32[]', space=smem, size = 0x4, offset = 0x4, fixed_abs, tag = 'smem constant byte address 0x4 - core index']
  #allocation1 [shape = 'u32[144,128]{1,0:T(1,128)}', space=vmem, size = 0x12000, scoped, tag = 'internal scratch']
  %s0 = inlined_call_operand.hbm [shape: f32[2,8,32], index: 0, kind: input, shape index: {}]
  %s1 = inlined_call_operand.vmem [shape: f32[2,1,8], index: 1, kind: input, shape index: {}]
  %s2 = inlined_call_operand.vmem [shape: f32[32,96], index: 2, kind: input, shape index: {}]
  %s3 = inlined_call_operand.vmem [shape: f32[1,96], index: 3, kind: input, shape index: {}]
  %s4 = inlined_call_operand.vmem [shape: f32[32,32], index: 4, kind: input, shape index: {}]
  %s5 = inlined_call_operand.vmem [shape: f32[1,32], index: 5, kind: input, shape index: {}]
  %s6 = inlined_call_operand.vmem [shape: f32[1,32], index: 6, kind: input, shape index: {}]
  %s7 = inlined_call_operand.hbm [shape: f32[1,32], index: 7, kind: input, shape index: {}]
  %s8 = inlined_call_operand.vmem [shape: f32[32,128], index: 8, kind: input, shape index: {}]
  %s9 = inlined_call_operand.hbm [shape: f32[1,128], index: 9, kind: input, shape index: {}]
  %s10 = inlined_call_operand.vmem [shape: f32[128,32], index: 10, kind: input, shape index: {}]
  %s11 = inlined_call_operand.vmem [shape: f32[1,32], index: 11, kind: input, shape index: {}]
  %s12 = inlined_call_operand.vmem [shape: f32[1,32], index: 12, kind: input, shape index: {}]
  %s13 = inlined_call_operand.vmem [shape: f32[1,32], index: 13, kind: input, shape index: {}]
  %s14 = inlined_call_operand.vmem [shape: f32[32,32], index: 14, kind: input, shape index: {}]
  %s15 = inlined_call_operand.vmem [shape: f32[1,32], index: 15, kind: input, shape index: {}]
  %s16 = inlined_call_operand.vmem [shape: f32[1,32], index: 16, kind: input, shape index: {}]
  %s17 = inlined_call_operand.vmem [shape: f32[1,32], index: 17, kind: input, shape index: {}]
  %s18 = inlined_call_operand.vmem [shape: f32[32,128], index: 18, kind: input, shape index: {}]
  %s19 = inlined_call_operand.vmem [shape: f32[1,128], index: 19, kind: input, shape index: {}]
  %s20 = inlined_call_operand.hbm [shape: f32[2,8,32], index: 20, kind: output, shape index: {0}]
  %s21 = inlined_call_operand.hbm [shape: f32[2,8,128], index: 21, kind: output, shape index: {1}]
  %22 = xla_tuple %s20, %s21
  %s23 = sld [smem:[#allocation0]]
  $region133: #{tpu_custom_call.1} parent=0
    _
  %s25 = ssub.s32 1, %s23
  %s26 = scalar_select 0, %s25, %s23
  $region1: #{tpu_custom_call.1} parent=0
    #allocation2 [shape = 'u8[8192]{0}', space=vmem, size = 0x2000, scoped, tag = 'input window, operand 0']
    #allocation3 [shape = 's32[2]{0}', space=sflag, size = 0x8, scoped, tag = 'scoped memory for tpu_custom_call.1']
    #allocation4 [shape = 's32[2]{0}', space=sflag, size = 0x8, scoped, tag = 'scoped memory for tpu_custom_call.1']
    #allocation5 [shape = 'u8[512]{0}', space=vmem, size = 0x400, scoped, tag = 'input window, operand 7, single buffered']
    #allocation6 [shape = 's32[1]{0}', space=sflag, size = 0x4, scoped, tag = 'scoped memory for tpu_custom_call.1']
    #allocation7 [shape = 'u8[512]{0}', space=vmem, size = 0x400, scoped, tag = 'input window, operand 9, single buffered']
    #allocation8 [shape = 'u8[8192]{0}', space=vmem, size = 0x2000, scoped, tag = 'output window, operand 0']
    #allocation9 [shape = 'u8[8192]{0}', space=vmem, size = 0x2000, scoped, tag = 'output window, operand 1']
    #allocation10 [shape = 's32[2]{0}', space=sflag, size = 0x8, scoped, tag = 'scoped memory for tpu_custom_call.1']
    %27 = vsyncpa [#allocation3], 0
    %s28 = scalar_lea.sflag [#allocation3], 1
    %29 = vsyncpa %s28, 0
    %30 = vsyncpa [#allocation6], 0
    %31 = vsyncpa [#allocation4], 0
    %s32 = scalar_lea.sflag [#allocation4], 1
    %33 = vsyncpa %s32, 0
    %34 = vsyncpa [#allocation10], 0
    %s35 = scalar_lea.sflag [#allocation10], 1
    %36 = vsyncpa %s35, 0
    loop: start=0, step=1, limit=4
    $region2: #{tpu_custom_call.1} parent=1 // loop_pre_header
      _
    $region3: #{tpu_custom_call.1} parent=1 // loop_header
      %s38 = sphi 0, %s42
      %p39 = scmp.ge.s32.totalorder %s38, 4
      %s48 = sphi 0, %s50
      %s51 = sphi 0, %s48
      %s52 = sphi 0, %s51
      %s68 = sphi 0, %s52
      %s74 = sphi 0, %s76
      %s77 = sphi 0, %s74
      %s78 = sphi 0, %s77
      %s94 = sphi 0, %s78
      %s98 = sphi 0, %s98
      %s100 = sphi 0, %s98
      %s101 = sphi 0, %s100
      %s115 = sphi 0, %s101
      %s119 = sphi 0, %s119
      %s121 = sphi 0, %s119
      %s122 = sphi 0, %s121
      %s136 = sphi 0, %s122
      %s140 = sphi 0, %s140
      %s142 = sphi 0, %s140
      %s143 = sphi 0, %s142
      %s157 = sphi 0, %s143
      %s161 = sphi 0, %s161
      %s163 = sphi 0, %s161
      %s164 = sphi 0, %s163
      %s178 = sphi 0, %s164
      %s182 = sphi 0, %s182
      %s184 = sphi 0, %s182
      %s185 = sphi 0, %s184
      %s199 = sphi 0, %s185
      %s203 = sphi 0, %s203
      %s205 = sphi 0, %s203
      %s206 = sphi 0, %s205
      %s220 = sphi 0, %s206
      %s224 = sphi 0, %s224
      %s226 = sphi 0, %s224
      %s227 = sphi 0, %s226
      %s241 = sphi 0, %s227
      %s245 = sphi 0, %s245
      %s247 = sphi 0, %s245
      %s248 = sphi 0, %s247
      %s262 = sphi 0, %s248
      %s266 = sphi 0, %s266
      %s268 = sphi 0, %s266
      %s269 = sphi 0, %s268
      %s283 = sphi 0, %s269
      %s287 = sphi 0, %s287
      %s289 = sphi 0, %s287
      %s290 = sphi 0, %s289
      %s304 = sphi 0, %s290
      %s308 = sphi 0, %s308
      %s310 = sphi 0, %s308
      %s311 = sphi 0, %s310
      %s325 = sphi 0, %s311
      %s329 = sphi 0, %s329
      %s331 = sphi 0, %s329
      %s332 = sphi 0, %s331
      %s346 = sphi 0, %s332
      %s350 = sphi 0, %s350
      %s352 = sphi 0, %s350
      %s353 = sphi 0, %s352
      %s367 = sphi 0, %s353
      %s371 = sphi 0, %s371
      %s373 = sphi 0, %s371
      %s374 = sphi 0, %s373
      %s388 = sphi 0, %s374
      %s392 = sphi 0, %s392
      %s394 = sphi 0, %s392
      %s395 = sphi 0, %s394
      %s409 = sphi 0, %s395
      %s413 = sphi 0, %s413
      %s415 = sphi 0, %s413
      %s416 = sphi 0, %s415
      %s430 = sphi 0, %s416
      %s434 = sphi 0, %s434
      %s436 = sphi 0, %s434
      %s437 = sphi 0, %s436
      %s451 = sphi 0, %s437
      %s455 = sphi 0, %s455
      %s457 = sphi 0, %s455
      %s458 = sphi 0, %s457
      %s472 = sphi 0, %s458
      %s478 = sphi 0, %s480
      %s481 = sphi 0, %s478
      %s482 = sphi 0, %s481
      %s498 = sphi 0, %s482
      %s504 = sphi 0, %s506
      %s507 = sphi 0, %s504
      %s508 = sphi 0, %s507
      %s524 = sphi 0, %s508
    $region4: #{tpu_custom_call.1} parent=1 // loop_header_branch
      %41 = sbr.rel (%p39) target = $region8
    $region5: #{tpu_custom_call.1} parent=1 // loop_body
      %s43 = ssub.s32 %s38, 1
      %s44 = ssub.s32 %s38, 2
      %s45 = sadd.s32 %s38, 1
      %s46 = ssub.s32 %s38, %s45
      %p47 = scmp.eq.s32.totalorder %s46, 0
      %s49 = sadd.s32 %s48, 1
      %s50 = scalar_select %p47, %s48, %s49
      %p53 = pneg %p47
      %p54 = scmp.eq.s32.totalorder %s38, 1
      %p55 = por %p53, %p54
      %p56 = scmp.ne.s32.totalorder %s48, %s51
      %p57 = scmp.eq.s32.totalorder %s38, 0
      %p58 = por %p56, %p57
      %p59 = scmp.ne.s32.totalorder %s48, %s51
      %p60 = scmp.eq.s32.totalorder %s43, 1
      %p61 = por %p59, %p60
      %p62 = scmp.ne.s32.totalorder %s51, %s52
      %p63 = scmp.eq.s32.totalorder %s43, 0
      %p64 = por %p62, %p63
      %p65 = scmp.ne.s32.totalorder %s51, %s52
      %p66 = scmp.eq.s32.totalorder %s44, 1
      %p67 = por %p65, %p66
      %p69 = scmp.ne.s32.totalorder %s52, %s68
      %p70 = scmp.eq.s32.totalorder %s44, 0
      %p71 = por %p69, %p70
      %s72 = ssub.s32 %s38, %s45
      %p73 = scmp.eq.s32.totalorder %s72, 0
      %s75 = sadd.s32 %s74, 1
      %s76 = scalar_select %p73, %s74, %s75
      %p79 = pneg %p73
      %p80 = scmp.eq.s32.totalorder %s38, 1
      %p81 = por %p79, %p80
      %p82 = scmp.ne.s32.totalorder %s74, %s77
      %p83 = scmp.eq.s32.totalorder %s38, 0
      %p84 = por %p82, %p83
      %p85 = scmp.ne.s32.totalorder %s74, %s77
      %p86 = scmp.eq.s32.totalorder %s43, 1
      %p87 = por %p85, %p86
      %p88 = scmp.ne.s32.totalorder %s77, %s78
      %p89 = scmp.eq.s32.totalorder %s43, 0
      %p90 = por %p88, %p89
      %p91 = scmp.ne.s32.totalorder %s77, %s78
      %p92 = scmp.eq.s32.totalorder %s44, 1
      %p93 = por %p91, %p92
      %p95 = scmp.ne.s32.totalorder %s78, %s94
      %p96 = scmp.eq.s32.totalorder %s44, 0
      %p97 = por %p95, %p96
      %s99 = sadd.s32 %s98, 1
      %p102 = scmp.eq.s32.totalorder %s38, 1
      %p103 = scmp.ne.s32.totalorder %s98, %s100
      %p104 = scmp.eq.s32.totalorder %s38, 0
      %p105 = por %p103, %p104
      %p106 = scmp.ne.s32.totalorder %s98, %s100
      %p107 = scmp.eq.s32.totalorder %s43, 1
      %p108 = por %p106, %p107
      %p109 = scmp.ne.s32.totalorder %s100, %s101
      %p110 = scmp.eq.s32.totalorder %s43, 0
      %p111 = por %p109, %p110
      %p112 = scmp.ne.s32.totalorder %s100, %s101
      %p113 = scmp.eq.s32.totalorder %s44, 1
      %p114 = por %p112, %p113
      %p116 = scmp.ne.s32.totalorder %s101, %s115
      %p117 = scmp.eq.s32.totalorder %s44, 0
      %p118 = por %p116, %p117
      %s120 = sadd.s32 %s119, 1
      %p123 = scmp.eq.s32.totalorder %s38, 1
      %p124 = scmp.ne.s32.totalorder %s119, %s121
      %p125 = scmp.eq.s32.totalorder %s38, 0
      %p126 = por %p124, %p125
      %p127 = scmp.ne.s32.totalorder %s119, %s121
      %p128 = scmp.eq.s32.totalorder %s43, 1
      %p129 = por %p127, %p128
      %p130 = scmp.ne.s32.totalorder %s121, %s122
      %p131 = scmp.eq.s32.totalorder %s43, 0
      %p132 = por %p130, %p131
      %p133 = scmp.ne.s32.totalorder %s121, %s122
      %p134 = scmp.eq.s32.totalorder %s44, 1
      %p135 = por %p133, %p134
      %p137 = scmp.ne.s32.totalorder %s122, %s136
      %p138 = scmp.eq.s32.totalorder %s44, 0
      %p139 = por %p137, %p138
      %s141 = sadd.s32 %s140, 1
      %p144 = scmp.eq.s32.totalorder %s38, 1
      %p145 = scmp.ne.s32.totalorder %s140, %s142
      %p146 = scmp.eq.s32.totalorder %s38, 0
      %p147 = por %p145, %p146
      %p148 = scmp.ne.s32.totalorder %s140, %s142
      %p149 = scmp.eq.s32.totalorder %s43, 1
      %p150 = por %p148, %p149
      %p151 = scmp.ne.s32.totalorder %s142, %s143
      %p152 = scmp.eq.s32.totalorder %s43, 0
      %p153 = por %p151, %p152
      %p154 = scmp.ne.s32.totalorder %s142, %s143
      %p155 = scmp.eq.s32.totalorder %s44, 1
      %p156 = por %p154, %p155
      %p158 = scmp.ne.s32.totalorder %s143, %s157
      %p159 = scmp.eq.s32.totalorder %s44, 0
      %p160 = por %p158, %p159
      %s162 = sadd.s32 %s161, 1
      %p165 = scmp.eq.s32.totalorder %s38, 1
      %p166 = scmp.ne.s32.totalorder %s161, %s163
      %p167 = scmp.eq.s32.totalorder %s38, 0
      %p168 = por %p166, %p167
      %p169 = scmp.ne.s32.totalorder %s161, %s163
      %p170 = scmp.eq.s32.totalorder %s43, 1
      %p171 = por %p169, %p170
      %p172 = scmp.ne.s32.totalorder %s163, %s164
      %p173 = scmp.eq.s32.totalorder %s43, 0
      %p174 = por %p172, %p173
      %p175 = scmp.ne.s32.totalorder %s163, %s164
      %p176 = scmp.eq.s32.totalorder %s44, 1
      %p177 = por %p175, %p176
      %p179 = scmp.ne.s32.totalorder %s164, %s178
      %p180 = scmp.eq.s32.totalorder %s44, 0
      %p181 = por %p179, %p180
      %s183 = sadd.s32 %s182, 1
      %p186 = scmp.eq.s32.totalorder %s38, 1
      %p187 = scmp.ne.s32.totalorder %s182, %s184
      %p188 = scmp.eq.s32.totalorder %s38, 0
      %p189 = por %p187, %p188
      %p190 = scmp.ne.s32.totalorder %s182, %s184
      %p191 = scmp.eq.s32.totalorder %s43, 1
      %p192 = por %p190, %p191
      %p193 = scmp.ne.s32.totalorder %s184, %s185
      %p194 = scmp.eq.s32.totalorder %s43, 0
      %p195 = por %p193, %p194
      %p196 = scmp.ne.s32.totalorder %s184, %s185
      %p197 = scmp.eq.s32.totalorder %s44, 1
      %p198 = por %p196, %p197
      %p200 = scmp.ne.s32.totalorder %s185, %s199
      %p201 = scmp.eq.s32.totalorder %s44, 0
      %p202 = por %p200, %p201
      %s204 = sadd.s32 %s203, 1
      %p207 = scmp.eq.s32.totalorder %s38, 1
      %p208 = scmp.ne.s32.totalorder %s203, %s205
      %p209 = scmp.eq.s32.totalorder %s38, 0
      %p210 = por %p208, %p209
      %p211 = scmp.ne.s32.totalorder %s203, %s205
      %p212 = scmp.eq.s32.totalorder %s43, 1
      %p213 = por %p211, %p212
      %p214 = scmp.ne.s32.totalorder %s205, %s206
      %p215 = scmp.eq.s32.totalorder %s43, 0
      %p216 = por %p214, %p215
      %p217 = scmp.ne.s32.totalorder %s205, %s206
      %p218 = scmp.eq.s32.totalorder %s44, 1
      %p219 = por %p217, %p218
      %p221 = scmp.ne.s32.totalorder %s206, %s220
      %p222 = scmp.eq.s32.totalorder %s44, 0
      %p223 = por %p221, %p222
      %s225 = sadd.s32 %s224, 1
      %p228 = scmp.eq.s32.totalorder %s38, 1
      %p229 = scmp.ne.s32.totalorder %s224, %s226
      %p230 = scmp.eq.s32.totalorder %s38, 0
      %p231 = por %p229, %p230
      %p232 = scmp.ne.s32.totalorder %s224, %s226
      %p233 = scmp.eq.s32.totalorder %s43, 1
      %p234 = por %p232, %p233
      %p235 = scmp.ne.s32.totalorder %s226, %s227
      %p236 = scmp.eq.s32.totalorder %s43, 0
      %p237 = por %p235, %p236
      %p238 = scmp.ne.s32.totalorder %s226, %s227
      %p239 = scmp.eq.s32.totalorder %s44, 1
      %p240 = por %p238, %p239
      %p242 = scmp.ne.s32.totalorder %s227, %s241
      %p243 = scmp.eq.s32.totalorder %s44, 0
      %p244 = por %p242, %p243
      %s246 = sadd.s32 %s245, 1
      %p249 = scmp.eq.s32.totalorder %s38, 1
      %p250 = scmp.ne.s32.totalorder %s245, %s247
      %p251 = scmp.eq.s32.totalorder %s38, 0
      %p252 = por %p250, %p251
      %p253 = scmp.ne.s32.totalorder %s245, %s247
      %p254 = scmp.eq.s32.totalorder %s43, 1
      %p255 = por %p253, %p254
      %p256 = scmp.ne.s32.totalorder %s247, %s248
      %p257 = scmp.eq.s32.totalorder %s43, 0
      %p258 = por %p256, %p257
      %p259 = scmp.ne.s32.totalorder %s247, %s248
      %p260 = scmp.eq.s32.totalorder %s44, 1
      %p261 = por %p259, %p260
      %p263 = scmp.ne.s32.totalorder %s248, %s262
      %p264 = scmp.eq.s32.totalorder %s44, 0
      %p265 = por %p263, %p264
      %s267 = sadd.s32 %s266, 1
      %p270 = scmp.eq.s32.totalorder %s38, 1
      %p271 = scmp.ne.s32.totalorder %s266, %s268
      %p272 = scmp.eq.s32.totalorder %s38, 0
      %p273 = por %p271, %p272
      %p274 = scmp.ne.s32.totalorder %s266, %s268
      %p275 = scmp.eq.s32.totalorder %s43, 1
      %p276 = por %p274, %p275
      %p277 = scmp.ne.s32.totalorder %s268, %s269
      %p278 = scmp.eq.s32.totalorder %s43, 0
      %p279 = por %p277, %p278
      %p280 = scmp.ne.s32.totalorder %s268, %s269
      %p281 = scmp.eq.s32.totalorder %s44, 1
      %p282 = por %p280, %p281
      %p284 = scmp.ne.s32.totalorder %s269, %s283
      %p285 = scmp.eq.s32.totalorder %s44, 0
      %p286 = por %p284, %p285
      %s288 = sadd.s32 %s287, 1
      %p291 = scmp.eq.s32.totalorder %s38, 1
      %p292 = scmp.ne.s32.totalorder %s287, %s289
      %p293 = scmp.eq.s32.totalorder %s38, 0
      %p294 = por %p292, %p293
      %p295 = scmp.ne.s32.totalorder %s287, %s289
      %p296 = scmp.eq.s32.totalorder %s43, 1
      %p297 = por %p295, %p296
      %p298 = scmp.ne.s32.totalorder %s289, %s290
      %p299 = scmp.eq.s32.totalorder %s43, 0
      %p300 = por %p298, %p299
      %p301 = scmp.ne.s32.totalorder %s289, %s290
      %p302 = scmp.eq.s32.totalorder %s44, 1
      %p303 = por %p301, %p302
      %p305 = scmp.ne.s32.totalorder %s290, %s304
      %p306 = scmp.eq.s32.totalorder %s44, 0
      %p307 = por %p305, %p306
      %s309 = sadd.s32 %s308, 1
      %p312 = scmp.eq.s32.totalorder %s38, 1
      %p313 = scmp.ne.s32.totalorder %s308, %s310
      %p314 = scmp.eq.s32.totalorder %s38, 0
      %p315 = por %p313, %p314
      %p316 = scmp.ne.s32.totalorder %s308, %s310
      %p317 = scmp.eq.s32.totalorder %s43, 1
      %p318 = por %p316, %p317
      %p319 = scmp.ne.s32.totalorder %s310, %s311
      %p320 = scmp.eq.s32.totalorder %s43, 0
      %p321 = por %p319, %p320
      %p322 = scmp.ne.s32.totalorder %s310, %s311
      %p323 = scmp.eq.s32.totalorder %s44, 1
      %p324 = por %p322, %p323
      %p326 = scmp.ne.s32.totalorder %s311, %s325
      %p327 = scmp.eq.s32.totalorder %s44, 0
      %p328 = por %p326, %p327
      %s330 = sadd.s32 %s329, 1
      %p333 = scmp.eq.s32.totalorder %s38, 1
      %p334 = scmp.ne.s32.totalorder %s329, %s331
      %p335 = scmp.eq.s32.totalorder %s38, 0
      %p336 = por %p334, %p335
      %p337 = scmp.ne.s32.totalorder %s329, %s331
      %p338 = scmp.eq.s32.totalorder %s43, 1
      %p339 = por %p337, %p338
      %p340 = scmp.ne.s32.totalorder %s331, %s332
      %p341 = scmp.eq.s32.totalorder %s43, 0
      %p342 = por %p340, %p341
      %p343 = scmp.ne.s32.totalorder %s331, %s332
      %p344 = scmp.eq.s32.totalorder %s44, 1
      %p345 = por %p343, %p344
      %p347 = scmp.ne.s32.totalorder %s332, %s346
      %p348 = scmp.eq.s32.totalorder %s44, 0
      %p349 = por %p347, %p348
      %s351 = sadd.s32 %s350, 1
      %p354 = scmp.eq.s32.totalorder %s38, 1
      %p355 = scmp.ne.s32.totalorder %s350, %s352
      %p356 = scmp.eq.s32.totalorder %s38, 0
      %p357 = por %p355, %p356
      %p358 = scmp.ne.s32.totalorder %s350, %s352
      %p359 = scmp.eq.s32.totalorder %s43, 1
      %p360 = por %p358, %p359
      %p361 = scmp.ne.s32.totalorder %s352, %s353
      %p362 = scmp.eq.s32.totalorder %s43, 0
      %p363 = por %p361, %p362
      %p364 = scmp.ne.s32.totalorder %s352, %s353
      %p365 = scmp.eq.s32.totalorder %s44, 1
      %p366 = por %p364, %p365
      %p368 = scmp.ne.s32.totalorder %s353, %s367
      %p369 = scmp.eq.s32.totalorder %s44, 0
      %p370 = por %p368, %p369
      %s372 = sadd.s32 %s371, 1
      %p375 = scmp.eq.s32.totalorder %s38, 1
      %p376 = scmp.ne.s32.totalorder %s371, %s373
      %p377 = scmp.eq.s32.totalorder %s38, 0
      %p378 = por %p376, %p377
      %p379 = scmp.ne.s32.totalorder %s371, %s373
      %p380 = scmp.eq.s32.totalorder %s43, 1
      %p381 = por %p379, %p380
      %p382 = scmp.ne.s32.totalorder %s373, %s374
      %p383 = scmp.eq.s32.totalorder %s43, 0
      %p384 = por %p382, %p383
      %p385 = scmp.ne.s32.totalorder %s373, %s374
      %p386 = scmp.eq.s32.totalorder %s44, 1
      %p387 = por %p385, %p386
      %p389 = scmp.ne.s32.totalorder %s374, %s388
      %p390 = scmp.eq.s32.totalorder %s44, 0
      %p391 = por %p389, %p390
      %s393 = sadd.s32 %s392, 1
      %p396 = scmp.eq.s32.totalorder %s38, 1
      %p397 = scmp.ne.s32.totalorder %s392, %s394
      %p398 = scmp.eq.s32.totalorder %s38, 0
      %p399 = por %p397, %p398
      %p400 = scmp.ne.s32.totalorder %s392, %s394
      %p401 = scmp.eq.s32.totalorder %s43, 1
      %p402 = por %p400, %p401
      %p403 = scmp.ne.s32.totalorder %s394, %s395
      %p404 = scmp.eq.s32.totalorder %s43, 0
      %p405 = por %p403, %p404
      %p406 = scmp.ne.s32.totalorder %s394, %s395
      %p407 = scmp.eq.s32.totalorder %s44, 1
      %p408 = por %p406, %p407
      %p410 = scmp.ne.s32.totalorder %s395, %s409
      %p411 = scmp.eq.s32.totalorder %s44, 0
      %p412 = por %p410, %p411
      %s414 = sadd.s32 %s413, 1
      %p417 = scmp.eq.s32.totalorder %s38, 1
      %p418 = scmp.ne.s32.totalorder %s413, %s415
      %p419 = scmp.eq.s32.totalorder %s38, 0
      %p420 = por %p418, %p419
      %p421 = scmp.ne.s32.totalorder %s413, %s415
      %p422 = scmp.eq.s32.totalorder %s43, 1
      %p423 = por %p421, %p422
      %p424 = scmp.ne.s32.totalorder %s415, %s416
      %p425 = scmp.eq.s32.totalorder %s43, 0
      %p426 = por %p424, %p425
      %p427 = scmp.ne.s32.totalorder %s415, %s416
      %p428 = scmp.eq.s32.totalorder %s44, 1
      %p429 = por %p427, %p428
      %p431 = scmp.ne.s32.totalorder %s416, %s430
      %p432 = scmp.eq.s32.totalorder %s44, 0
      %p433 = por %p431, %p432
      %s435 = sadd.s32 %s434, 1
      %p438 = scmp.eq.s32.totalorder %s38, 1
      %p439 = scmp.ne.s32.totalorder %s434, %s436
      %p440 = scmp.eq.s32.totalorder %s38, 0
      %p441 = por %p439, %p440
      %p442 = scmp.ne.s32.totalorder %s434, %s436
      %p443 = scmp.eq.s32.totalorder %s43, 1
      %p444 = por %p442, %p443
      %p445 = scmp.ne.s32.totalorder %s436, %s437
      %p446 = scmp.eq.s32.totalorder %s43, 0
      %p447 = por %p445, %p446
      %p448 = scmp.ne.s32.totalorder %s436, %s437
      %p449 = scmp.eq.s32.totalorder %s44, 1
      %p450 = por %p448, %p449
      %p452 = scmp.ne.s32.totalorder %s437, %s451
      %p453 = scmp.eq.s32.totalorder %s44, 0
      %p454 = por %p452, %p453
      %s456 = sadd.s32 %s455, 1
      %p459 = scmp.eq.s32.totalorder %s38, 1
      %p460 = scmp.ne.s32.totalorder %s455, %s457
      %p461 = scmp.eq.s32.totalorder %s38, 0
      %p462 = por %p460, %p461
      %p463 = scmp.ne.s32.totalorder %s455, %s457
      %p464 = scmp.eq.s32.totalorder %s43, 1
      %p465 = por %p463, %p464
      %p466 = scmp.ne.s32.totalorder %s457, %s458
      %p467 = scmp.eq.s32.totalorder %s43, 0
      %p468 = por %p466, %p467
      %p469 = scmp.ne.s32.totalorder %s457, %s458
      %p470 = scmp.eq.s32.totalorder %s44, 1
      %p471 = por %p469, %p470
      %p473 = scmp.ne.s32.totalorder %s458, %s472
      %p474 = scmp.eq.s32.totalorder %s44, 0
      %p475 = por %p473, %p474
      %s476 = ssub.s32 %s38, %s45
      %p477 = scmp.eq.s32.totalorder %s476, 0
      %s479 = sadd.s32 %s478, 1
      %s480 = scalar_select %p477, %s478, %s479
      %p483 = pneg %p477
      %p484 = scmp.eq.s32.totalorder %s38, 1
      %p485 = por %p483, %p484
      %p486 = scmp.ne.s32.totalorder %s478, %s481
      %p487 = scmp.eq.s32.totalorder %s38, 0
      %p488 = por %p486, %p487
      %p489 = scmp.ne.s32.totalorder %s478, %s481
      %p490 = scmp.eq.s32.totalorder %s43, 1
      %p491 = por %p489, %p490
      %p492 = scmp.ne.s32.totalorder %s481, %s482
      %p493 = scmp.eq.s32.totalorder %s43, 0
      %p494 = por %p492, %p493
      %p495 = scmp.ne.s32.totalorder %s481, %s482
      %p496 = scmp.eq.s32.totalorder %s44, 1
      %p497 = por %p495, %p496
      %p499 = scmp.ne.s32.totalorder %s482, %s498
      %p500 = scmp.eq.s32.totalorder %s44, 0
      %p501 = por %p499, %p500
      %s502 = ssub.s32 %s38, %s45
      %p503 = scmp.eq.s32.totalorder %s502, 0
      %s505 = sadd.s32 %s504, 1
      %s506 = scalar_select %p503, %s504, %s505
      %p509 = pneg %p503
      %p510 = scmp.eq.s32.totalorder %s38, 1
      %p511 = por %p509, %p510
      %p512 = scmp.ne.s32.totalorder %s504, %s507
      %p513 = scmp.eq.s32.totalorder %s38, 0
      %p514 = por %p512, %p513
      %p515 = scmp.ne.s32.totalorder %s504, %s507
      %p516 = scmp.eq.s32.totalorder %s43, 1
      %p517 = por %p515, %p516
      %p518 = scmp.ne.s32.totalorder %s507, %s508
      %p519 = scmp.eq.s32.totalorder %s43, 0
      %p520 = por %p518, %p519
      %p521 = scmp.ne.s32.totalorder %s507, %s508
      %p522 = scmp.eq.s32.totalorder %s44, 1
      %p523 = por %p521, %p522
      %p525 = scmp.ne.s32.totalorder %s508, %s524
      %p526 = scmp.eq.s32.totalorder %s44, 0
      %p527 = por %p525, %p526
      %p528 = scmp.le.s32.totalorder 1, %s38
      %p529 = scmp.lt.s32.totalorder %s38, 3
      %p530 = pnand %p528, %p529
      %p531 = pneg %p530
      // Predicated region
      $region9: #{tpu_custom_call.1} parent=5 // pred_check
        _
      $region10: #{tpu_custom_call.1} parent=5 // pred_check_branch
        %533 = sbr.rel (%p530) target = $region12
      $region11: #{tpu_custom_call.1} parent=5 // pred_region
        %s534 = ssub.s32 %s38, 1
        // Predicated region
        $region13: #{tpu_custom_call.1} parent=11 // pred_check
          %p535 = pneg %p111
        $region14: #{tpu_custom_call.1} parent=11 // pred_check_branch
          %537 = sbr.rel (%p535) target = $region16
        $region15: #{tpu_custom_call.1} parent=11 // pred_region
          _
        $region16: #{tpu_custom_call.1} parent=11 // pred_fallthru
          _
        // Predicated region
        $region17: #{tpu_custom_call.1} parent=11 // pred_check
          %p538 = pneg %p132
        $region18: #{tpu_custom_call.1} parent=11 // pred_check_branch
          %540 = sbr.rel (%p538) target = $region20
        $region19: #{tpu_custom_call.1} parent=11 // pred_region
          _
        $region20: #{tpu_custom_call.1} parent=11 // pred_fallthru
          _
        // Predicated region
        $region21: #{tpu_custom_call.1} parent=11 // pred_check
          %p541 = pneg %p153
        $region22: #{tpu_custom_call.1} parent=11 // pred_check_branch
          %543 = sbr.rel (%p541) target = $region24
        $region23: #{tpu_custom_call.1} parent=11 // pred_region
          _
        $region24: #{tpu_custom_call.1} parent=11 // pred_fallthru
          _
        // Predicated region
        $region25: #{tpu_custom_call.1} parent=11 // pred_check
          %p544 = pneg %p174
        $region26: #{tpu_custom_call.1} parent=11 // pred_check_branch
          %546 = sbr.rel (%p544) target = $region28
        $region27: #{tpu_custom_call.1} parent=11 // pred_region
          _
        $region28: #{tpu_custom_call.1} parent=11 // pred_fallthru
          _
        // Predicated region
        $region29: #{tpu_custom_call.1} parent=11 // pred_check
          %p547 = pneg %p195
        $region30: #{tpu_custom_call.1} parent=11 // pred_check_branch
          %549 = sbr.rel (%p547) target = $region32
        $region31: #{tpu_custom_call.1} parent=11 // pred_region
          _
        $region32: #{tpu_custom_call.1} parent=11 // pred_fallthru
          _
        // Predicated region
        $region33: #{tpu_custom_call.1} parent=11 // pred_check
          %p550 = pneg %p216
        $region34: #{tpu_custom_call.1} parent=11 // pred_check_branch
          %552 = sbr.rel (%p550) target = $region36
        $region35: #{tpu_custom_call.1} parent=11 // pred_region
          %s554 = ssub.s32 16, 16
          %555 = vsyncadd [#allocation6], %s554
          %s557 = sshll.u32 [#allocation5], 4
          %s558 = int_to_ptr.vmem [resolvable:$true] %s557
          %560 = dma.hbm_to_vmem [thread:$0]  %s7, 16, %s558, [#allocation6]
        $region36: #{tpu_custom_call.1} parent=11 // pred_fallthru
          _
        // Predicated region
        $region37: #{tpu_custom_call.1} parent=11 // pred_check
          %p561 = pneg %p237
        $region38: #{tpu_custom_call.1} parent=11 // pred_check_branch
          %563 = sbr.rel (%p561) target = $region40
        $region39: #{tpu_custom_call.1} parent=11 // pred_region
          _
        $region40: #{tpu_custom_call.1} parent=11 // pred_fallthru
          _
        // Predicated region
        $region41: #{tpu_custom_call.1} parent=11 // pred_check
          %p564 = pneg %p258
        $region42: #{tpu_custom_call.1} parent=11 // pred_check_branch
          %566 = sbr.rel (%p564) target = $region44
        $region43: #{tpu_custom_call.1} parent=11 // pred_region
          %s568 = ssub.s32 16, 16
          %569 = vsyncadd [#allocation6], %s568
          %s571 = sshll.u32 [#allocation7], 4
          %s572 = int_to_ptr.vmem [resolvable:$true] %s571
          %574 = dma.hbm_to_vmem [thread:$0]  %s9, 16, %s572, [#allocation6]
        $region44: #{tpu_custom_call.1} parent=11 // pred_fallthru
          _
        // Predicated region
        $region45: #{tpu_custom_call.1} parent=11 // pred_check
          %p575 = pneg %p279
        $region46: #{tpu_custom_call.1} parent=11 // pred_check_branch
          %577 = sbr.rel (%p575) target = $region48
        $region47: #{tpu_custom_call.1} parent=11 // pred_region
          _
        $region48: #{tpu_custom_call.1} parent=11 // pred_fallthru
          _
        // Predicated region
        $region49: #{tpu_custom_call.1} parent=11 // pred_check
          %p578 = pneg %p300
        $region50: #{tpu_custom_call.1} parent=11 // pred_check_branch
          %580 = sbr.rel (%p578) target = $region52
        $region51: #{tpu_custom_call.1} parent=11 // pred_region
          _
        $region52: #{tpu_custom_call.1} parent=11 // pred_fallthru
          _
        // Predicated region
        $region53: #{tpu_custom_call.1} parent=11 // pred_check
          %p581 = pneg %p321
        $region54: #{tpu_custom_call.1} parent=11 // pred_check_branch
          %583 = sbr.rel (%p581) target = $region56
        $region55: #{tpu_custom_call.1} parent=11 // pred_region
          _
        $region56: #{tpu_custom_call.1} parent=11 // pred_fallthru
          _
        // Predicated region
        $region57: #{tpu_custom_call.1} parent=11 // pred_check
          %p584 = pneg %p342
        $region58: #{tpu_custom_call.1} parent=11 // pred_check_branch
          %586 = sbr.rel (%p584) target = $region60
        $region59: #{tpu_custom_call.1} parent=11 // pred_region
          _
        $region60: #{tpu_custom_call.1} parent=11 // pred_fallthru
          _
        // Predicated region
        $region61: #{tpu_custom_call.1} parent=11 // pred_check
          %p587 = pneg %p363
        $region62: #{tpu_custom_call.1} parent=11 // pred_check_branch
          %589 = sbr.rel (%p587) target = $region64
        $region63: #{tpu_custom_call.1} parent=11 // pred_region
          _
        $region64: #{tpu_custom_call.1} parent=11 // pred_fallthru
          _
        // Predicated region
        $region65: #{tpu_custom_call.1} parent=11 // pred_check
          %p590 = pneg %p384
        $region66: #{tpu_custom_call.1} parent=11 // pred_check_branch
          %592 = sbr.rel (%p590) target = $region68
        $region67: #{tpu_custom_call.1} parent=11 // pred_region
          _
        $region68: #{tpu_custom_call.1} parent=11 // pred_fallthru
          _
        // Predicated region
        $region69: #{tpu_custom_call.1} parent=11 // pred_check
          %p593 = pneg %p405
        $region70: #{tpu_custom_call.1} parent=11 // pred_check_branch
          %595 = sbr.rel (%p593) target = $region72
        $region71: #{tpu_custom_call.1} parent=11 // pred_region
          _
        $region72: #{tpu_custom_call.1} parent=11 // pred_fallthru
          _
        // Predicated region
        $region73: #{tpu_custom_call.1} parent=11 // pred_check
          %p596 = pneg %p426
        $region74: #{tpu_custom_call.1} parent=11 // pred_check_branch
          %598 = sbr.rel (%p596) target = $region76
        $region75: #{tpu_custom_call.1} parent=11 // pred_region
          _
        $region76: #{tpu_custom_call.1} parent=11 // pred_fallthru
          _
        // Predicated region
        $region77: #{tpu_custom_call.1} parent=11 // pred_check
          %p599 = pneg %p447
        $region78: #{tpu_custom_call.1} parent=11 // pred_check_branch
          %601 = sbr.rel (%p599) target = $region80
        $region79: #{tpu_custom_call.1} parent=11 // pred_region
          _
        $region80: #{tpu_custom_call.1} parent=11 // pred_fallthru
          _
        // Predicated region
        $region81: #{tpu_custom_call.1} parent=11 // pred_check
          %p602 = pneg %p468
        $region82: #{tpu_custom_call.1} parent=11 // pred_check_branch
          %604 = sbr.rel (%p602) target = $region84
        $region83: #{tpu_custom_call.1} parent=11 // pred_region
          _
        $region84: #{tpu_custom_call.1} parent=11 // pred_fallthru
          _
      $region12: #{tpu_custom_call.1} parent=5 // pred_fallthru
        _
      %p605 = scmp.lt.s32.totalorder %s38, 2
      // Predicated region
      $region85: #{tpu_custom_call.1} parent=5 // pred_check
        %p606 = pneg %p605
      $region86: #{tpu_custom_call.1} parent=5 // pred_check_branch
        %608 = sbr.rel (%p606) target = $region88
      $region87: #{tpu_custom_call.1} parent=5 // pred_region
        // Predicated region
        $region89: #{tpu_custom_call.1} parent=87 // pred_check
          %p609 = pneg %p58
        $region90: #{tpu_custom_call.1} parent=87 // pred_check_branch
          %611 = sbr.rel (%p609) target = $region92
        $region91: #{tpu_custom_call.1} parent=87 // pred_region
          %s612 = sand.u32 %s48, 1
          %s613 = scalar_lea.sflag [#allocation3], %s612
          %s614 = sand.u32 %s48, 1
          %s615 = smul.addr %s614, 8
          %s616 = scalar_lea.vmem [#allocation2], %s615
          %s618 = ssub.s32 128, 128
          %619 = vsyncadd %s613, %s618
          %s620 = smul.addr %s38, 128
          %s621 = scalar_lea.hbm %s0, %s620
          %s623 = sshll.u32 %s616, 4
          %s624 = int_to_ptr.vmem [resolvable:$true] %s623
          %626 = dma.hbm_to_vmem [thread:$0]  %s621, 128, %s624, %s613
        $region92: #{tpu_custom_call.1} parent=87 // pred_fallthru
          _
        // Predicated region
        $region93: #{tpu_custom_call.1} parent=87 // pred_check
          %p627 = pneg %p84
        $region94: #{tpu_custom_call.1} parent=87 // pred_check_branch
          %629 = sbr.rel (%p627) target = $region96
        $region95: #{tpu_custom_call.1} parent=87 // pred_region
          %p630 = scmp.lt.s32.totalorder %s38, 1
          %s631 = scalar_select %p630, %s38, 1
          %s632 = scalar_lea.vmem %s1, %s631
        $region96: #{tpu_custom_call.1} parent=87 // pred_fallthru
          _
      $region88: #{tpu_custom_call.1} parent=5 // pred_fallthru
        _
      %p633 = scmp.le.s32.totalorder 1, %s38
      %p634 = scmp.lt.s32.totalorder %s38, 3
      %p635 = pnand %p633, %p634
      %p636 = pneg %p635
      // Predicated region
      $region97: #{tpu_custom_call.1} parent=5 // pred_check
        _
      $region98: #{tpu_custom_call.1} parent=5 // pred_check_branch
        %638 = sbr.rel (%p635) target = $region100
      $region99: #{tpu_custom_call.1} parent=5 // pred_region
        %s639 = ssub.s32 %s38, 1
        %s640 = sand.u32 %s51, 1
        %s641 = scalar_lea.sflag [#allocation3], %s640
        %s642 = sand.u32 %s51, 1
        %s643 = smul.addr %s642, 8
        %s644 = scalar_lea.vmem [#allocation2], %s643
        // Predicated region
        $region101: #{tpu_custom_call.1} parent=99 // pred_check
          %p645 = pneg %p64
        $region102: #{tpu_custom_call.1} parent=99 // pred_check_branch
          %647 = sbr.rel (%p645) target = $region104
        $region103: #{tpu_custom_call.1} parent=99 // pred_region
          %648 = dma.done %s641, 128
        $region104: #{tpu_custom_call.1} parent=99 // pred_fallthru
          _
        // Predicated region
        $region105: #{tpu_custom_call.1} parent=99 // pred_check
          %p649 = pneg %p216
        $region106: #{tpu_custom_call.1} parent=99 // pred_check_branch
          %651 = sbr.rel (%p649) target = $region108
        $region107: #{tpu_custom_call.1} parent=99 // pred_region
          %652 = dma.done [#allocation6], 16
        $region108: #{tpu_custom_call.1} parent=99 // pred_fallthru
          _
        // Predicated region
        $region109: #{tpu_custom_call.1} parent=99 // pred_check
          %p653 = pneg %p258
        $region110: #{tpu_custom_call.1} parent=99 // pred_check_branch
          %655 = sbr.rel (%p653) target = $region112
        $region111: #{tpu_custom_call.1} parent=99 // pred_region
          %656 = dma.done [#allocation6], 16
        $region112: #{tpu_custom_call.1} parent=99 // pred_fallthru
          _
        %s657 = sand.u32 %s51, 1
        %s658 = scalar_lea.sflag [#allocation3], %s657
        %s659 = sand.u32 %s51, 1
        %s660 = smul.addr %s659, 8
        %s661 = scalar_lea.vmem [#allocation2], %s660
        %p662 = pneg %p64
        %p663 = pneg %p61
        %p664 = scmp.lt.s32.totalorder %s43, 1
        %s665 = scalar_select %p664, %s43, 1
        %s666 = scalar_lea.vmem %s1, %s665
        %p667 = pneg %p90
        %p668 = pneg %p87
        %p669 = pneg %p111
        %p670 = pneg %p108
        %p671 = pneg %p132
        %p672 = pneg %p129
        %p673 = pneg %p153
        %p674 = pneg %p150
        %p675 = pneg %p174
        %p676 = pneg %p171
        %p677 = pneg %p195
        %p678 = pneg %p192
        %p679 = pneg %p216
        %p680 = pneg %p213
        %p681 = pneg %p237
        %p682 = pneg %p234
        %p683 = pneg %p258
        %p684 = pneg %p255
        %p685 = pneg %p279
        %p686 = pneg %p276
        %p687 = pneg %p300
        %p688 = pneg %p297
        %p689 = pneg %p321
        %p690 = pneg %p318
        %p691 = pneg %p342
        %p692 = pneg %p339
        %p693 = pneg %p363
        %p694 = pneg %p360
        %p695 = pneg %p384
        %p696 = pneg %p381
        %p697 = pneg %p405
        %p698 = pneg %p402
        %p699 = pneg %p426
        %p700 = pneg %p423
        %p701 = pneg %p447
        %p702 = pneg %p444
        %p703 = pneg %p468
        %p704 = pneg %p465
        %p705 = pneg %p494
        %p706 = pneg %p491
        %s707 = sand.u32 %s481, 1
        %s708 = scalar_lea.sflag [#allocation4], %s707
        %s709 = sand.u32 %s481, 1
        %s710 = smul.addr %s709, 8
        %s711 = scalar_lea.vmem [#allocation8], %s710
        %p712 = pneg %p520
        %p713 = pneg %p517
        %s714 = sand.u32 %s507, 1
        %s715 = scalar_lea.sflag [#allocation10], %s714
        %s716 = sand.u32 %s507, 1
        %s717 = smul.addr %s716, 8
        %s718 = scalar_lea.vmem [#allocation9], %s717
        %p719 = scmp.lt.s32.totalorder %s43, 1
        %s720 = scalar_select %p719, %s43, 1
        %s721 = scalar_lea.vmem %s1, %s720
        %v722 = vld [vmem:[%s644] sm:$0xff]
        %v723 = vld [vmem:[%s721] sm:$0x1]
        %v724 = vld [vmem:[%s3] sm:$0x1]
        %v725 = vld [vmem:[%s5] sm:$0x1]
        %v726 = vld [vmem:[%s6] sm:$0x1]
        %v727 = vld [vmem:[#allocation5] sm:$0x1]
        %v728 = vld [vmem:[#allocation7] sm:$0x1]
        %v729 = vld [vmem:[%s11] sm:$0x1]
        %v730 = vld [vmem:[%s12] sm:$0x1]
        %v731 = vld [vmem:[%s13] sm:$0x1]
        %v732 = vld [vmem:[%s15] sm:$0x1]
        %v733 = vld [vmem:[%s16] sm:$0x1]
        %v734 = vld [vmem:[%s17] sm:$0x1]
        %v735 = vld [vmem:[%s19] sm:$0x1]
        %v736 = vld [vmem:[%s2] sm:$0xff]
        %v737 = vld [vmem:[%s2 + $0x8] sm:$0xff]
        %v738 = vld [vmem:[%s2 + $0x10] sm:$0xff]
        %v739 = vld [vmem:[%s2 + $0x18] sm:$0xff]
        %v741 = vlaneseq
        %v742 = vshrl.u32 %v741, 7
        %v743 = vsub.s32 0, %v742
        %v744 = vrot.slane %v724, %v743
        %vm746 = vcmask 261120
        %v748 = vsel %vm746, %v722, 0
        %750 = vmatprep.subr.mxu0 0.0
        %751 = vmatpush1.msra.mxu0 %v736
        %752 = vmatprep.subr.mxu0 0.0
        %753 = vmatpush1.msra.mxu0 %v737
        %754 = vmatprep.subr.mxu0 0.0
        %755 = vmatpush1.msra.mxu0 %v738
        %756 = vmatprep.subr.mxu0 0.0
        %757 = vmatpush1.msra.mxu0 %v739
        %758 = vmatprep.subr.mxu0 0.0
        %759 = vmatpush1.msra.mxu0 0.0
        %760 = vmatprep.subr.mxu0 0.0
        %761 = vmatpush1.msra.mxu0 0.0
        %762 = vmatprep.subr.mxu0 0.0
        %763 = vmatpush1.msra.mxu0 0.0
        %764 = vmatprep.subr.mxu0 0.0
        %765 = vmatpush1.msra.mxu0 0.0
        %766 = vmatprep.subr.mxu0 0.0
        %767 = vmatpush1.msra.mxu0 0.0
        %768 = vmatprep.subr.mxu0 0.0
        %769 = vmatpush1.msra.mxu0 0.0
        %770 = vmatprep.subr.mxu0 0.0
        %771 = vmatpush1.msra.mxu0 0.0
        %772 = vmatprep.subr.mxu0 0.0
        %773 = vmatpush1.msra.mxu0 0.0
        %774 = vmatprep.subr.mxu0 0.0
        %775 = vmatpush1.msra.mxu0 0.0
        %776 = vmatprep.subr.mxu0 0.0
        %777 = vmatpush1.msra.mxu0 0.0
        %778 = vmatprep.subr.mxu0 0.0
        %779 = vmatpush1.msra.mxu0 0.0
        %780 = vmatprep.subr.mxu0 0.0
        %781 = vmatpush1.msra.mxu0 0.0
        %782 = vmatprep.subr.mxu0 0.0
        %783 = vmatpush1.msra.mxu0 0.0
        %784 = vmatprep.subr.mxu0 0.0
        %785 = vmatpush1.msra.mxu0 0.0
        %786 = vmatprep.subr.mxu0 0.0
        %787 = vmatpush1.msra.mxu0 0.0
        %788 = vmatprep.subr.mxu0 0.0
        %789 = vmatpush1.msra.mxu0 0.0
        %790 = vmatprep.subr.mxu0 0.0
        %791 = vmatpush1.msra.mxu0 0.0
        %792 = vmatprep.subr.mxu0 0.0
        %793 = vmatpush1.msra.mxu0 0.0
        %794 = vmatprep.subr.mxu0 0.0
        %795 = vmatpush1.msra.mxu0 0.0
        %796 = vmatprep.subr.mxu0 0.0
        %797 = vmatpush1.msra.mxu0 0.0
        %798 = vmatprep.subr.mxu0 0.0
        %799 = vmatpush1.msra.mxu0 0.0
        %800 = vmatprep.subr.mxu0 0.0
        %801 = vmatpush1.msra.mxu0 0.0
        %802 = vmatprep.subr.mxu0 0.0
        %803 = vmatpush1.msra.mxu0 0.0
        %804 = vmatprep.subr.mxu0 0.0
        %805 = vmatpush1.msra.mxu0 0.0
        %806 = vmatprep.subr.mxu0 0.0
        %807 = vmatpush1.msra.mxu0 0.0
        %808 = vmatprep.subr.mxu0 0.0
        %809 = vmatpush1.msra.mxu0 0.0
        %810 = vmatprep.subr.mxu0 0.0
        %811 = vmatpush1.msra.mxu0 0.0
        %812 = vmatprep.subr.mxu0 0.0
        %813 = vmatpush1.msra.mxu0 0.0
        %814 = vmatprep.mubr.f32.mxu0 0.0
        %815 = vmatmul.mubr.f32.gmra.mrb[0].mxu0 %v748
        %v816 = vpop.f32.mrb[0].mxu0
        %v817 = vadd.f32 %v744, %v816
        %v818 = vpop.f32.mrb[0].mxu0
        %819 = vdwg.mxu0
        %821 = vrot.lane.b32.xlu0 %v817, 96
        %v822 = vpop.permute.xlu0 %821
        %vm823 = vcmask 64512
        %v824 = vsel %vm823, %v817, 0
        %v826 = vsel %vm823, %v822, 0
        %828 = vmatprep.subr.mxu0 0.0
        %829 = vmatpush1.xpose.msra.mxu0 %v826
        %830 = vmatprep.subr.mxu0 0.0
        %831 = vmatpush1.xpose.msra.mxu0 0.0
        %832 = vmatprep.subr.mxu0 0.0
        %833 = vmatpush1.xpose.msra.mxu0 0.0
        %834 = vmatprep.subr.mxu0 0.0
        %835 = vmatpush1.xpose.msra.mxu0 0.0
        %836 = vmatprep.subr.mxu0 0.0
        %837 = vmatpush1.xpose.msra.mxu0 0.0
        %838 = vmatprep.subr.mxu0 0.0
        %839 = vmatpush1.xpose.msra.mxu0 0.0
        %840 = vmatprep.subr.mxu0 0.0
        %841 = vmatpush1.xpose.msra.mxu0 0.0
        %842 = vmatprep.subr.mxu0 0.0
        %843 = vmatpush1.xpose.msra.mxu0 0.0
        %844 = vmatprep.subr.mxu0 0.0
        %845 = vmatpush1.xpose.msra.mxu0 0.0
        %846 = vmatprep.subr.mxu0 0.0
        %847 = vmatpush1.xpose.msra.mxu0 0.0
        %848 = vmatprep.subr.mxu0 0.0
        %849 = vmatpush1.xpose.msra.mxu0 0.0
        %850 = vmatprep.subr.mxu0 0.0
        %851 = vmatpush1.xpose.msra.mxu0 0.0
        %852 = vmatprep.subr.mxu0 0.0
        %853 = vmatpush1.xpose.msra.mxu0 0.0
        %854 = vmatprep.subr.mxu0 0.0
        %855 = vmatpush1.xpose.msra.mxu0 0.0
        %856 = vmatprep.subr.mxu0 0.0
        %857 = vmatpush1.xpose.msra.mxu0 0.0
        %858 = vmatprep.subr.mxu0 0.0
        %859 = vmatpush1.xpose.msra.mxu0 0.0
        %860 = vmatprep.subr.mxu0 0.0
        %861 = vmatpush1.xpose.msra.mxu0 0.0
        %862 = vmatprep.subr.mxu0 0.0
        %863 = vmatpush1.xpose.msra.mxu0 0.0
        %864 = vmatprep.subr.mxu0 0.0
        %865 = vmatpush1.xpose.msra.mxu0 0.0
        %866 = vmatprep.subr.mxu0 0.0
        %867 = vmatpush1.xpose.msra.mxu0 0.0
        %868 = vmatprep.subr.mxu0 0.0
        %869 = vmatpush1.xpose.msra.mxu0 0.0
        %870 = vmatprep.subr.mxu0 0.0
        %871 = vmatpush1.xpose.msra.mxu0 0.0
        %872 = vmatprep.subr.mxu0 0.0
        %873 = vmatpush1.xpose.msra.mxu0 0.0
        %874 = vmatprep.subr.mxu0 0.0
        %875 = vmatpush1.xpose.msra.mxu0 0.0
        %876 = vmatprep.subr.mxu0 0.0
        %877 = vmatpush1.xpose.msra.mxu0 0.0
        %878 = vmatprep.subr.mxu0 0.0
        %879 = vmatpush1.xpose.msra.mxu0 0.0
        %880 = vmatprep.subr.mxu0 0.0
        %881 = vmatpush1.xpose.msra.mxu0 0.0
        %882 = vmatprep.subr.mxu0 0.0
        %883 = vmatpush1.xpose.msra.mxu0 0.0
        %884 = vmatprep.subr.mxu0 0.0
        %885 = vmatpush1.xpose.msra.mxu0 0.0
        %886 = vmatprep.subr.mxu0 0.0
        %887 = vmatpush1.xpose.msra.mxu0 0.0
        %888 = vmatprep.subr.mxu0 0.0
        %889 = vmatpush1.xpose.msra.mxu0 0.0
        %890 = vmatprep.subr.mxu0 0.0
        %891 = vmatpush1.xpose.msra.mxu0 0.0
        %892 = vmatprep.mubr.f32.mxu0 0.0
        %893 = vmatmul.mubr.f32.gmra.mrb[0].mxu0 %v824
        %v894 = vpop.f32.mrb[0].mxu0
        %v895 = vadd.f32 0.0, %v894
        %v896 = vpop.f32.mrb[0].mxu0
        %897 = vdwg.mxu0
        %v898 = vmul.f32 %v895, 0.35355338
        %v900 = vlaneseq
        %v901 = vshrl.u32 %v900, 7
        %v902 = vsub.s32 0, %v901
        %v903 = vrot.slane %v723, %v902
        %v905 = vadd.f32 %v898, %v903
        %v906 = vsel %vm823, %v905, -inf
        %907 = vmax.xlane.f32.xlu0 %v906
        %v908 = vpop.xlane.xlu0 %907
        %v909 = vsub.f32 %v905, %v908
        %v910 = vmul.f32 %v909, 1.442695
        %v911 = vpow.pop %v910
        %v912 = vsel %vm823, %v911, 0.0
        %913 = vadd.xlane.f32.xlu0 %v912
        %v914 = vpop.xlane.xlu0 %913
        %v915 = vrcp.pop %v914
        %v916 = vmul.f32 %v911, %v915
        %917 = vrot.lane.b32.xlu0 %v817, 64
        %v918 = vpop.permute.xlu0 %917
        %v921 = vsel %vm823, %v916, 0
        %923 = vmatprep.subr.mxu0 0.0
        %924 = vmatpush1.msra.mxu0 %v918
        %925 = vmatprep.subr.mxu0 0.0
        %926 = vmatpush1.msra.mxu0 0.0
        %927 = vmatprep.subr.mxu0 0.0
        %928 = vmatpush1.msra.mxu0 0.0
        %929 = vmatprep.subr.mxu0 0.0
        %930 = vmatpush1.msra.mxu0 0.0
        %931 = vmatprep.subr.mxu0 0.0
        %932 = vmatpush1.msra.mxu0 0.0
        %933 = vmatprep.subr.mxu0 0.0
        %934 = vmatpush1.msra.mxu0 0.0
        %935 = vmatprep.subr.mxu0 0.0
        %936 = vmatpush1.msra.mxu0 0.0
        %937 = vmatprep.subr.mxu0 0.0
        %938 = vmatpush1.msra.mxu0 0.0
        %939 = vmatprep.subr.mxu0 0.0
        %940 = vmatpush1.msra.mxu0 0.0
        %941 = vmatprep.subr.mxu0 0.0
        %942 = vmatpush1.msra.mxu0 0.0
        %943 = vmatprep.subr.mxu0 0.0
        %944 = vmatpush1.msra.mxu0 0.0
        %945 = vmatprep.subr.mxu0 0.0
        %946 = vmatpush1.msra.mxu0 0.0
        %947 = vmatprep.subr.mxu0 0.0
        %948 = vmatpush1.msra.mxu0 0.0
        %949 = vmatprep.subr.mxu0 0.0
        %950 = vmatpush1.msra.mxu0 0.0
        %951 = vmatprep.subr.mxu0 0.0
        %952 = vmatpush1.msra.mxu0 0.0
        %953 = vmatprep.subr.mxu0 0.0
        %954 = vmatpush1.msra.mxu0 0.0
        %955 = vmatprep.subr.mxu0 0.0
        %956 = vmatpush1.msra.mxu0 0.0
        %957 = vmatprep.subr.mxu0 0.0
        %958 = vmatpush1.msra.mxu0 0.0
        %959 = vmatprep.subr.mxu0 0.0
        %960 = vmatpush1.msra.mxu0 0.0
        %961 = vmatprep.subr.mxu0 0.0
        %962 = vmatpush1.msra.mxu0 0.0
        %963 = vmatprep.subr.mxu0 0.0
        %964 = vmatpush1.msra.mxu0 0.0
        %965 = vmatprep.subr.mxu0 0.0
        %966 = vmatpush1.msra.mxu0 0.0
        %967 = vmatprep.subr.mxu0 0.0
        %968 = vmatpush1.msra.mxu0 0.0
        %969 = vmatprep.subr.mxu0 0.0
        %970 = vmatpush1.msra.mxu0 0.0
        %971 = vmatprep.subr.mxu0 0.0
        %972 = vmatpush1.msra.mxu0 0.0
        %973 = vmatprep.subr.mxu0 0.0
        %974 = vmatpush1.msra.mxu0 0.0
        %975 = vmatprep.subr.mxu0 0.0
        %976 = vmatpush1.msra.mxu0 0.0
        %977 = vmatprep.subr.mxu0 0.0
        %978 = vmatpush1.msra.mxu0 0.0
        %979 = vmatprep.subr.mxu0 0.0
        %980 = vmatpush1.msra.mxu0 0.0
        %981 = vmatprep.subr.mxu0 0.0
        %982 = vmatpush1.msra.mxu0 0.0
        %983 = vmatprep.subr.mxu0 0.0
        %984 = vmatpush1.msra.mxu0 0.0
        %985 = vmatprep.subr.mxu0 0.0
        %986 = vmatpush1.msra.mxu0 0.0
        %987 = vmatprep.mubr.f32.mxu0 0.0
        %988 = vmatmul.mubr.f32.gmra.mrb[0].mxu0 %v921
        %v989 = vpop.f32.mrb[0].mxu0
        %v990 = vadd.f32 0.0, %v989
        %v991 = vpop.f32.mrb[0].mxu0
        %992 = vdwg.mxu0
        %993 = vrot.lane.b32.xlu0 %v817, 120
        %v994 = vpop.permute.xlu0 %993
        %995 = vrot.lane.b32.xlu0 %v817, 88
        %v996 = vpop.permute.xlu0 %995
        %v997 = vsel %vm823, %v994, 0
        %v999 = vsel %vm823, %v996, 0
        %1001 = vmatprep.subr.mxu0 0.0
        %1002 = vmatpush1.xpose.msra.mxu0 %v999
        %1003 = vmatprep.subr.mxu0 0.0
        %1004 = vmatpush1.xpose.msra.mxu0 0.0
        %1005 = vmatprep.subr.mxu0 0.0
        %1006 = vmatpush1.xpose.msra.mxu0 0.0
        %1007 = vmatprep.subr.mxu0 0.0
        %1008 = vmatpush1.xpose.msra.mxu0 0.0
        %1009 = vmatprep.subr.mxu0 0.0
        %1010 = vmatpush1.xpose.msra.mxu0 0.0
        %1011 = vmatprep.subr.mxu0 0.0
        %1012 = vmatpush1.xpose.msra.mxu0 0.0
        %1013 = vmatprep.subr.mxu0 0.0
        %1014 = vmatpush1.xpose.msra.mxu0 0.0
        %1015 = vmatprep.subr.mxu0 0.0
        %1016 = vmatpush1.xpose.msra.mxu0 0.0
        %1017 = vmatprep.subr.mxu0 0.0
        %1018 = vmatpush1.xpose.msra.mxu0 0.0
        %1019 = vmatprep.subr.mxu0 0.0
        %1020 = vmatpush1.xpose.msra.mxu0 0.0
        %1021 = vmatprep.subr.mxu0 0.0
        %1022 = vmatpush1.xpose.msra.mxu0 0.0
        %1023 = vmatprep.subr.mxu0 0.0
        %1024 = vmatpush1.xpose.msra.mxu0 0.0
        %1025 = vmatprep.subr.mxu0 0.0
        %1026 = vmatpush1.xpose.msra.mxu0 0.0
        %1027 = vmatprep.subr.mxu0 0.0
        %1028 = vmatpush1.xpose.msra.mxu0 0.0
        %1029 = vmatprep.subr.mxu0 0.0
        %1030 = vmatpush1.xpose.msra.mxu0 0.0
        %1031 = vmatprep.subr.mxu0 0.0
        %1032 = vmatpush1.xpose.msra.mxu0 0.0
        %1033 = vmatprep.subr.mxu0 0.0
        %1034 = vmatpush1.xpose.msra.mxu0 0.0
        %1035 = vmatprep.subr.mxu0 0.0
        %1036 = vmatpush1.xpose.msra.mxu0 0.0
        %1037 = vmatprep.subr.mxu0 0.0
        %1038 = vmatpush1.xpose.msra.mxu0 0.0
        %1039 = vmatprep.subr.mxu0 0.0
        %1040 = vmatpush1.xpose.msra.mxu0 0.0
        %1041 = vmatprep.subr.mxu0 0.0
        %1042 = vmatpush1.xpose.msra.mxu0 0.0
        %1043 = vmatprep.subr.mxu0 0.0
        %1044 = vmatpush1.xpose.msra.mxu0 0.0
        %1045 = vmatprep.subr.mxu0 0.0
        %1046 = vmatpush1.xpose.msra.mxu0 0.0
        %1047 = vmatprep.subr.mxu0 0.0
        %1048 = vmatpush1.xpose.msra.mxu0 0.0
        %1049 = vmatprep.subr.mxu0 0.0
        %1050 = vmatpush1.xpose.msra.mxu0 0.0
        %1051 = vmatprep.subr.mxu0 0.0
        %1052 = vmatpush1.xpose.msra.mxu0 0.0
        %1053 = vmatprep.subr.mxu0 0.0
        %1054 = vmatpush1.xpose.msra.mxu0 0.0
        %1055 = vmatprep.subr.mxu0 0.0
        %1056 = vmatpush1.xpose.msra.mxu0 0.0
        %1057 = vmatprep.subr.mxu0 0.0
        %1058 = vmatpush1.xpose.msra.mxu0 0.0
        %1059 = vmatprep.subr.mxu0 0.0
        %1060 = vmatpush1.xpose.msra.mxu0 0.0
        %1061 = vmatprep.subr.mxu0 0.0
        %1062 = vmatpush1.xpose.msra.mxu0 0.0
        %1063 = vmatprep.subr.mxu0 0.0
        %1064 = vmatpush1.xpose.msra.mxu0 0.0
        %1065 = vmatprep.mubr.f32.mxu0 0.0
        %1066 = vmatmul.mubr.f32.gmra.mrb[0].mxu0 %v997
        %v1067 = vpop.f32.mrb[0].mxu0
        %v1068 = vadd.f32 0.0, %v1067
        %v1069 = vpop.f32.mrb[0].mxu0
        %1070 = vdwg.mxu0
        %v1071 = vmul.f32 %v1068, 0.35355338
        %v1072 = vadd.f32 %v1071, %v903
        %v1073 = vsel %vm823, %v1072, -inf
        %1074 = vmax.xlane.f32.xlu0 %v1073
        %v1075 = vpop.xlane.xlu0 %1074
        %v1076 = vsub.f32 %v1072, %v1075
        %v1077 = vmul.f32 %v1076, 1.442695
        %v1078 = vpow.pop %v1077
        %v1079 = vsel %vm823, %v1078, 0.0
        %1080 = vadd.xlane.f32.xlu0 %v1079
        %v1081 = vpop.xlane.xlu0 %1080
        %v1082 = vrcp.pop %v1081
        %v1083 = vmul.f32 %v1078, %v1082
        %1084 = vrot.lane.b32.xlu0 %v817, 56
        %v1085 = vpop.permute.xlu0 %1084
        %v1088 = vsel %vm823, %v1083, 0
        %1090 = vmatprep.subr.mxu0 0.0
        %1091 = vmatpush1.msra.mxu0 %v1085
        %1092 = vmatprep.subr.mxu0 0.0
        %1093 = vmatpush1.msra.mxu0 0.0
        %1094 = vmatprep.subr.mxu0 0.0
        %1095 = vmatpush1.msra.mxu0 0.0
        %1096 = vmatprep.subr.mxu0 0.0
        %1097 = vmatpush1.msra.mxu0 0.0
        %1098 = vmatprep.subr.mxu0 0.0
        %1099 = vmatpush1.msra.mxu0 0.0
        %1100 = vmatprep.subr.mxu0 0.0
        %1101 = vmatpush1.msra.mxu0 0.0
        %1102 = vmatprep.subr.mxu0 0.0
        %1103 = vmatpush1.msra.mxu0 0.0
        %1104 = vmatprep.subr.mxu0 0.0
        %1105 = vmatpush1.msra.mxu0 0.0
        %1106 = vmatprep.subr.mxu0 0.0
        %1107 = vmatpush1.msra.mxu0 0.0
        %1108 = vmatprep.subr.mxu0 0.0
        %1109 = vmatpush1.msra.mxu0 0.0
        %1110 = vmatprep.subr.mxu0 0.0
        %1111 = vmatpush1.msra.mxu0 0.0
        %1112 = vmatprep.subr.mxu0 0.0
        %1113 = vmatpush1.msra.mxu0 0.0
        %1114 = vmatprep.subr.mxu0 0.0
        %1115 = vmatpush1.msra.mxu0 0.0
        %1116 = vmatprep.subr.mxu0 0.0
        %1117 = vmatpush1.msra.mxu0 0.0
        %1118 = vmatprep.subr.mxu0 0.0
        %1119 = vmatpush1.msra.mxu0 0.0
        %1120 = vmatprep.subr.mxu0 0.0
        %1121 = vmatpush1.msra.mxu0 0.0
        %1122 = vmatprep.subr.mxu0 0.0
        %1123 = vmatpush1.msra.mxu0 0.0
        %1124 = vmatprep.subr.mxu0 0.0
        %1125 = vmatpush1.msra.mxu0 0.0
        %1126 = vmatprep.subr.mxu0 0.0
        %1127 = vmatpush1.msra.mxu0 0.0
        %1128 = vmatprep.subr.mxu0 0.0
        %1129 = vmatpush1.msra.mxu0 0.0
        %1130 = vmatprep.subr.mxu0 0.0
        %1131 = vmatpush1.msra.mxu0 0.0
        %1132 = vmatprep.subr.mxu0 0.0
        %1133 = vmatpush1.msra.mxu0 0.0
        %1134 = vmatprep.subr.mxu0 0.0
        %1135 = vmatpush1.msra.mxu0 0.0
        %1136 = vmatprep.subr.mxu0 0.0
        %1137 = vmatpush1.msra.mxu0 0.0
        %1138 = vmatprep.subr.mxu0 0.0
        %1139 = vmatpush1.msra.mxu0 0.0
        %1140 = vmatprep.subr.mxu0 0.0
        %1141 = vmatpush1.msra.mxu0 0.0
        %1142 = vmatprep.subr.mxu0 0.0
        %1143 = vmatpush1.msra.mxu0 0.0
        %1144 = vmatprep.subr.mxu0 0.0
        %1145 = vmatpush1.msra.mxu0 0.0
        %1146 = vmatprep.subr.mxu0 0.0
        %1147 = vmatpush1.msra.mxu0 0.0
        %1148 = vmatprep.subr.mxu0 0.0
        %1149 = vmatpush1.msra.mxu0 0.0
        %1150 = vmatprep.subr.mxu0 0.0
        %1151 = vmatpush1.msra.mxu0 0.0
        %1152 = vmatprep.subr.mxu0 0.0
        %1153 = vmatpush1.msra.mxu0 0.0
        %1154 = vmatprep.mubr.f32.mxu0 0.0
        %1155 = vmatmul.mubr.f32.gmra.mrb[0].mxu0 %v1088
        %v1156 = vpop.f32.mrb[0].mxu0
        %v1157 = vadd.f32 0.0, %v1156
        %v1158 = vpop.f32.mrb[0].mxu0
        %1159 = vdwg.mxu0
        %1160 = vrot.lane.b32.xlu0 %v817, 112
        %v1161 = vpop.permute.xlu0 %1160
        %1162 = vrot.lane.b32.xlu0 %v817, 80
        %v1163 = vpop.permute.xlu0 %1162
        %v1164 = vsel %vm823, %v1161, 0
        %v1166 = vsel %vm823, %v1163, 0
        %1168 = vmatprep.subr.mxu0 0.0
        %1169 = vmatpush1.xpose.msra.mxu0 %v1166
        %1170 = vmatprep.subr.mxu0 0.0
        %1171 = vmatpush1.xpose.msra.mxu0 0.0
        %1172 = vmatprep.subr.mxu0 0.0
        %1173 = vmatpush1.xpose.msra.mxu0 0.0
        %1174 = vmatprep.subr.mxu0 0.0
        %1175 = vmatpush1.xpose.msra.mxu0 0.0
        %1176 = vmatprep.subr.mxu0 0.0
        %1177 = vmatpush1.xpose.msra.mxu0 0.0
        %1178 = vmatprep.subr.mxu0 0.0
        %1179 = vmatpush1.xpose.msra.mxu0 0.0
        %1180 = vmatprep.subr.mxu0 0.0
        %1181 = vmatpush1.xpose.msra.mxu0 0.0
        %1182 = vmatprep.subr.mxu0 0.0
        %1183 = vmatpush1.xpose.msra.mxu0 0.0
        %1184 = vmatprep.subr.mxu0 0.0
        %1185 = vmatpush1.xpose.msra.mxu0 0.0
        %1186 = vmatprep.subr.mxu0 0.0
        %1187 = vmatpush1.xpose.msra.mxu0 0.0
        %1188 = vmatprep.subr.mxu0 0.0
        %1189 = vmatpush1.xpose.msra.mxu0 0.0
        %1190 = vmatprep.subr.mxu0 0.0
        %1191 = vmatpush1.xpose.msra.mxu0 0.0
        %1192 = vmatprep.subr.mxu0 0.0
        %1193 = vmatpush1.xpose.msra.mxu0 0.0
        %1194 = vmatprep.subr.mxu0 0.0
        %1195 = vmatpush1.xpose.msra.mxu0 0.0
        %1196 = vmatprep.subr.mxu0 0.0
        %1197 = vmatpush1.xpose.msra.mxu0 0.0
        %1198 = vmatprep.subr.mxu0 0.0
        %1199 = vmatpush1.xpose.msra.mxu0 0.0
        %1200 = vmatprep.subr.mxu0 0.0
        %1201 = vmatpush1.xpose.msra.mxu0 0.0
        %1202 = vmatprep.subr.mxu0 0.0
        %1203 = vmatpush1.xpose.msra.mxu0 0.0
        %1204 = vmatprep.subr.mxu0 0.0
        %1205 = vmatpush1.xpose.msra.mxu0 0.0
        %1206 = vmatprep.subr.mxu0 0.0
        %1207 = vmatpush1.xpose.msra.mxu0 0.0
        %1208 = vmatprep.subr.mxu0 0.0
        %1209 = vmatpush1.xpose.msra.mxu0 0.0
        %1210 = vmatprep.subr.mxu0 0.0
        %1211 = vmatpush1.xpose.msra.mxu0 0.0
        %1212 = vmatprep.subr.mxu0 0.0
        %1213 = vmatpush1.xpose.msra.mxu0 0.0
        %1214 = vmatprep.subr.mxu0 0.0
        %1215 = vmatpush1.xpose.msra.mxu0 0.0
        %1216 = vmatprep.subr.mxu0 0.0
        %1217 = vmatpush1.xpose.msra.mxu0 0.0
        %1218 = vmatprep.subr.mxu0 0.0
        %1219 = vmatpush1.xpose.msra.mxu0 0.0
        %1220 = vmatprep.subr.mxu0 0.0
        %1221 = vmatpush1.xpose.msra.mxu0 0.0
        %1222 = vmatprep.subr.mxu0 0.0
        %1223 = vmatpush1.xpose.msra.mxu0 0.0
        %1224 = vmatprep.subr.mxu0 0.0
        %1225 = vmatpush1.xpose.msra.mxu0 0.0
        %1226 = vmatprep.subr.mxu0 0.0
        %1227 = vmatpush1.xpose.msra.mxu0 0.0
        %1228 = vmatprep.subr.mxu0 0.0
        %1229 = vmatpush1.xpose.msra.mxu0 0.0
        %1230 = vmatprep.subr.mxu0 0.0
        %1231 = vmatpush1.xpose.msra.mxu0 0.0
        %1232 = vmatprep.mubr.f32.mxu0 0.0
        %1233 = vmatmul.mubr.f32.gmra.mrb[0].mxu0 %v1164
        %v1234 = vpop.f32.mrb[0].mxu0
        %v1235 = vadd.f32 0.0, %v1234
        %v1236 = vpop.f32.mrb[0].mxu0
        %1237 = vdwg.mxu0
        %v1238 = vmul.f32 %v1235, 0.35355338
        %v1239 = vadd.f32 %v1238, %v903
        %v1240 = vsel %vm823, %v1239, -inf
        %1241 = vmax.xlane.f32.xlu0 %v1240
        %v1242 = vpop.xlane.xlu0 %1241
        %v1243 = vsub.f32 %v1239, %v1242
        %v1244 = vmul.f32 %v1243, 1.442695
        %v1245 = vpow.pop %v1244
        %v1246 = vsel %vm823, %v1245, 0.0
        %1247 = vadd.xlane.f32.xlu0 %v1246
        %v1248 = vpop.xlane.xlu0 %1247
        %v1249 = vrcp.pop %v1248
        %v1250 = vmul.f32 %v1245, %v1249
        %1251 = vrot.lane.b32.xlu0 %v817, 48
        %v1252 = vpop.permute.xlu0 %1251
        %v1255 = vsel %vm823, %v1250, 0
        %1257 = vmatprep.subr.mxu0 0.0
        %1258 = vmatpush1.msra.mxu0 %v1252
        %1259 = vmatprep.subr.mxu0 0.0
        %1260 = vmatpush1.msra.mxu0 0.0
        %1261 = vmatprep.subr.mxu0 0.0
        %1262 = vmatpush1.msra.mxu0 0.0
        %1263 = vmatprep.subr.mxu0 0.0
        %1264 = vmatpush1.msra.mxu0 0.0
        %1265 = vmatprep.subr.mxu0 0.0
        %1266 = vmatpush1.msra.mxu0 0.0
        %1267 = vmatprep.subr.mxu0 0.0
        %1268 = vmatpush1.msra.mxu0 0.0
        %1269 = vmatprep.subr.mxu0 0.0
        %1270 = vmatpush1.msra.mxu0 0.0
        %1271 = vmatprep.subr.mxu0 0.0
        %1272 = vmatpush1.msra.mxu0 0.0
        %1273 = vmatprep.subr.mxu0 0.0
        %1274 = vmatpush1.msra.mxu0 0.0
        %1275 = vmatprep.subr.mxu0 0.0
        %1276 = vmatpush1.msra.mxu0 0.0
        %1277 = vmatprep.subr.mxu0 0.0
        %1278 = vmatpush1.msra.mxu0 0.0
        %1279 = vmatprep.subr.mxu0 0.0
        %1280 = vmatpush1.msra.mxu0 0.0
        %1281 = vmatprep.subr.mxu0 0.0
        %1282 = vmatpush1.msra.mxu0 0.0
        %1283 = vmatprep.subr.mxu0 0.0
        %1284 = vmatpush1.msra.mxu0 0.0
        %1285 = vmatprep.subr.mxu0 0.0
        %1286 = vmatpush1.msra.mxu0 0.0
        %1287 = vmatprep.subr.mxu0 0.0
        %1288 = vmatpush1.msra.mxu0 0.0
        %1289 = vmatprep.subr.mxu0 0.0
        %1290 = vmatpush1.msra.mxu0 0.0
        %1291 = vmatprep.subr.mxu0 0.0
        %1292 = vmatpush1.msra.mxu0 0.0
        %1293 = vmatprep.subr.mxu0 0.0
        %1294 = vmatpush1.msra.mxu0 0.0
        %1295 = vmatprep.subr.mxu0 0.0
        %1296 = vmatpush1.msra.mxu0 0.0
        %1297 = vmatprep.subr.mxu0 0.0
        %1298 = vmatpush1.msra.mxu0 0.0
        %1299 = vmatprep.subr.mxu0 0.0
        %1300 = vmatpush1.msra.mxu0 0.0
        %1301 = vmatprep.subr.mxu0 0.0
        %1302 = vmatpush1.msra.mxu0 0.0
        %1303 = vmatprep.subr.mxu0 0.0
        %1304 = vmatpush1.msra.mxu0 0.0
        %1305 = vmatprep.subr.mxu0 0.0
        %1306 = vmatpush1.msra.mxu0 0.0
        %1307 = vmatprep.subr.mxu0 0.0
        %1308 = vmatpush1.msra.mxu0 0.0
        %1309 = vmatprep.subr.mxu0 0.0
        %1310 = vmatpush1.msra.mxu0 0.0
        %1311 = vmatprep.subr.mxu0 0.0
        %1312 = vmatpush1.msra.mxu0 0.0
        %1313 = vmatprep.subr.mxu0 0.0
        %1314 = vmatpush1.msra.mxu0 0.0
        %1315 = vmatprep.subr.mxu0 0.0
        %1316 = vmatpush1.msra.mxu0 0.0
        %1317 = vmatprep.subr.mxu0 0.0
        %1318 = vmatpush1.msra.mxu0 0.0
        %1319 = vmatprep.subr.mxu0 0.0
        %1320 = vmatpush1.msra.mxu0 0.0
        %1321 = vmatprep.mubr.f32.mxu0 0.0
        %1322 = vmatmul.mubr.f32.gmra.mrb[0].mxu0 %v1255
        %v1323 = vpop.f32.mrb[0].mxu0
        %v1324 = vadd.f32 0.0, %v1323
        %v1325 = vpop.f32.mrb[0].mxu0
        %1326 = vdwg.mxu0
        %1327 = vrot.lane.b32.xlu0 %v817, 104
        %v1328 = vpop.permute.xlu0 %1327
        %1329 = vrot.lane.b32.xlu0 %v817, 72
        %v1330 = vpop.permute.xlu0 %1329
        %v1331 = vsel %vm823, %v1328, 0
        %v1333 = vsel %vm823, %v1330, 0
        %1335 = vmatprep.subr.mxu0 0.0
        %1336 = vmatpush1.xpose.msra.mxu0 %v1333
        %1337 = vmatprep.subr.mxu0 0.0
        %1338 = vmatpush1.xpose.msra.mxu0 0.0
        %1339 = vmatprep.subr.mxu0 0.0
        %1340 = vmatpush1.xpose.msra.mxu0 0.0
        %1341 = vmatprep.subr.mxu0 0.0
        %1342 = vmatpush1.xpose.msra.mxu0 0.0
        %1343 = vmatprep.subr.mxu0 0.0
        %1344 = vmatpush1.xpose.msra.mxu0 0.0
        %1345 = vmatprep.subr.mxu0 0.0
        %1346 = vmatpush1.xpose.msra.mxu0 0.0
        %1347 = vmatprep.subr.mxu0 0.0
        %1348 = vmatpush1.xpose.msra.mxu0 0.0
        %1349 = vmatprep.subr.mxu0 0.0
        %1350 = vmatpush1.xpose.msra.mxu0 0.0
        %1351 = vmatprep.subr.mxu0 0.0
        %1352 = vmatpush1.xpose.msra.mxu0 0.0
        %1353 = vmatprep.subr.mxu0 0.0
        %1354 = vmatpush1.xpose.msra.mxu0 0.0
        %1355 = vmatprep.subr.mxu0 0.0
        %1356 = vmatpush1.xpose.msra.mxu0 0.0
        %1357 = vmatprep.subr.mxu0 0.0
        %1358 = vmatpush1.xpose.msra.mxu0 0.0
        %1359 = vmatprep.subr.mxu0 0.0
        %1360 = vmatpush1.xpose.msra.mxu0 0.0
        %1361 = vmatprep.subr.mxu0 0.0
        %1362 = vmatpush1.xpose.msra.mxu0 0.0
        %1363 = vmatprep.subr.mxu0 0.0
        %1364 = vmatpush1.xpose.msra.mxu0 0.0
        %1365 = vmatprep.subr.mxu0 0.0
        %1366 = vmatpush1.xpose.msra.mxu0 0.0
        %1367 = vmatprep.subr.mxu0 0.0
        %1368 = vmatpush1.xpose.msra.mxu0 0.0
        %1369 = vmatprep.subr.mxu0 0.0
        %1370 = vmatpush1.xpose.msra.mxu0 0.0
        %1371 = vmatprep.subr.mxu0 0.0
        %1372 = vmatpush1.xpose.msra.mxu0 0.0
        %1373 = vmatprep.subr.mxu0 0.0
        %1374 = vmatpush1.xpose.msra.mxu0 0.0
        %1375 = vmatprep.subr.mxu0 0.0
        %1376 = vmatpush1.xpose.msra.mxu0 0.0
        %1377 = vmatprep.subr.mxu0 0.0
        %1378 = vmatpush1.xpose.msra.mxu0 0.0
        %1379 = vmatprep.subr.mxu0 0.0
        %1380 = vmatpush1.xpose.msra.mxu0 0.0
        %1381 = vmatprep.subr.mxu0 0.0
        %1382 = vmatpush1.xpose.msra.mxu0 0.0
        %1383 = vmatprep.subr.mxu0 0.0
        %1384 = vmatpush1.xpose.msra.mxu0 0.0
        %1385 = vmatprep.subr.mxu0 0.0
        %1386 = vmatpush1.xpose.msra.mxu0 0.0
        %1387 = vmatprep.subr.mxu0 0.0
        %1388 = vmatpush1.xpose.msra.mxu0 0.0
        %1389 = vmatprep.subr.mxu0 0.0
        %1390 = vmatpush1.xpose.msra.mxu0 0.0
        %1391 = vmatprep.subr.mxu0 0.0
        %1392 = vmatpush1.xpose.msra.mxu0 0.0
        %1393 = vmatprep.subr.mxu0 0.0
        %1394 = vmatpush1.xpose.msra.mxu0 0.0
        %1395 = vmatprep.subr.mxu0 0.0
        %1396 = vmatpush1.xpose.msra.mxu0 0.0
        %1397 = vmatprep.subr.mxu0 0.0
        %1398 = vmatpush1.xpose.msra.mxu0 0.0
        %1399 = vmatprep.mubr.f32.mxu0 0.0
        %1400 = vmatmul.mubr.f32.gmra.mrb[0].mxu0 %v1331
        %v1401 = vpop.f32.mrb[0].mxu0
        %v1402 = vadd.f32 0.0, %v1401
        %v1403 = vpop.f32.mrb[0].mxu0
        %1404 = vdwg.mxu0
        %v1405 = vmul.f32 %v1402, 0.35355338
        %v1406 = vadd.f32 %v1405, %v903
        %v1407 = vsel %vm823, %v1406, -inf
        %1408 = vmax.xlane.f32.xlu0 %v1407
        %v1409 = vpop.xlane.xlu0 %1408
        %v1410 = vsub.f32 %v1406, %v1409
        %v1411 = vmul.f32 %v1410, 1.442695
        %v1412 = vpow.pop %v1411
        %v1413 = vsel %vm823, %v1412, 0.0
        %1414 = vadd.xlane.f32.xlu0 %v1413
        %v1415 = vpop.xlane.xlu0 %1414
        %v1416 = vrcp.pop %v1415
        %v1417 = vmul.f32 %v1412, %v1416
        %1418 = vrot.lane.b32.xlu0 %v817, 40
        %v1419 = vpop.permute.xlu0 %1418
        %v1422 = vsel %vm823, %v1417, 0
        %1424 = vmatprep.subr.mxu0 0.0
        %1425 = vmatpush1.msra.mxu0 %v1419
        %1426 = vmatprep.subr.mxu0 0.0
        %1427 = vmatpush1.msra.mxu0 0.0
        %1428 = vmatprep.subr.mxu0 0.0
        %1429 = vmatpush1.msra.mxu0 0.0
        %1430 = vmatprep.subr.mxu0 0.0
        %1431 = vmatpush1.msra.mxu0 0.0
        %1432 = vmatprep.subr.mxu0 0.0
        %1433 = vmatpush1.msra.mxu0 0.0
        %1434 = vmatprep.subr.mxu0 0.0
        %1435 = vmatpush1.msra.mxu0 0.0
        %1436 = vmatprep.subr.mxu0 0.0
        %1437 = vmatpush1.msra.mxu0 0.0
        %1438 = vmatprep.subr.mxu0 0.0
        %1439 = vmatpush1.msra.mxu0 0.0
        %1440 = vmatprep.subr.mxu0 0.0
        %1441 = vmatpush1.msra.mxu0 0.0
        %1442 = vmatprep.subr.mxu0 0.0
        %1443 = vmatpush1.msra.mxu0 0.0
        %1444 = vmatprep.subr.mxu0 0.0
        %1445 = vmatpush1.msra.mxu0 0.0
        %1446 = vmatprep.subr.mxu0 0.0
        %1447 = vmatpush1.msra.mxu0 0.0
        %1448 = vmatprep.subr.mxu0 0.0
        %1449 = vmatpush1.msra.mxu0 0.0
        %1450 = vmatprep.subr.mxu0 0.0
        %1451 = vmatpush1.msra.mxu0 0.0
        %1452 = vmatprep.subr.mxu0 0.0
        %1453 = vmatpush1.msra.mxu0 0.0
        %1454 = vmatprep.subr.mxu0 0.0
        %1455 = vmatpush1.msra.mxu0 0.0
        %1456 = vmatprep.subr.mxu0 0.0
        %1457 = vmatpush1.msra.mxu0 0.0
        %1458 = vmatprep.subr.mxu0 0.0
        %1459 = vmatpush1.msra.mxu0 0.0
        %1460 = vmatprep.subr.mxu0 0.0
        %1461 = vmatpush1.msra.mxu0 0.0
        %1462 = vmatprep.subr.mxu0 0.0
        %1463 = vmatpush1.msra.mxu0 0.0
        %1464 = vmatprep.subr.mxu0 0.0
        %1465 = vmatpush1.msra.mxu0 0.0
        %1466 = vmatprep.subr.mxu0 0.0
        %1467 = vmatpush1.msra.mxu0 0.0
        %1468 = vmatprep.subr.mxu0 0.0
        %1469 = vmatpush1.msra.mxu0 0.0
        %1470 = vmatprep.subr.mxu0 0.0
        %1471 = vmatpush1.msra.mxu0 0.0
        %1472 = vmatprep.subr.mxu0 0.0
        %1473 = vmatpush1.msra.mxu0 0.0
        %1474 = vmatprep.subr.mxu0 0.0
        %1475 = vmatpush1.msra.mxu0 0.0
        %1476 = vmatprep.subr.mxu0 0.0
        %1477 = vmatpush1.msra.mxu0 0.0
        %1478 = vmatprep.subr.mxu0 0.0
        %1479 = vmatpush1.msra.mxu0 0.0
        %1480 = vmatprep.subr.mxu0 0.0
        %1481 = vmatpush1.msra.mxu0 0.0
        %1482 = vmatprep.subr.mxu0 0.0
        %1483 = vmatpush1.msra.mxu0 0.0
        %1484 = vmatprep.subr.mxu0 0.0
        %1485 = vmatpush1.msra.mxu0 0.0
        %1486 = vmatprep.subr.mxu0 0.0
        %1487 = vmatpush1.msra.mxu0 0.0
        %1488 = vmatprep.mubr.f32.mxu0 0.0
        %1489 = vmatmul.mubr.f32.gmra.mrb[0].mxu0 %v1422
        %v1490 = vpop.f32.mrb[0].mxu0
        %v1491 = vadd.f32 0.0, %v1490
        %v1492 = vpop.f32.mrb[0].mxu0
        %1493 = vdwg.mxu0
        %1495 = vrot.lane.b32.xlu0 %v1157, 8
        %v1496 = vpop.permute.xlu0 %1495
        %1499 = vrot.lane.b32.xlu0 %v1324, 16
        %v1500 = vpop.permute.xlu0 %1499
        %1503 = vrot.lane.b32.xlu0 %v1491, 24
        %v1504 = vpop.permute.xlu0 %1503
        %v1506 = vsel %vm823, %v990, %v1496
        %vm1507 = vcmask 130048
        %v1508 = vsel %vm1507, %v1506, %v1500
        %vm1509 = vcmask 195584
        %v1510 = vsel %vm1509, %v1508, %v1504
        %v1511 = vld [vmem:[%s4] sm:$0xff]
        %v1512 = vld [vmem:[%s4 + $0x8] sm:$0xff]
        %v1513 = vld [vmem:[%s4 + $0x10] sm:$0xff]
        %v1514 = vld [vmem:[%s4 + $0x18] sm:$0xff]
        %v1516 = vlaneseq
        %v1517 = vshrl.u32 %v1516, 7
        %v1518 = vsub.s32 0, %v1517
        %v1519 = vrot.slane %v725, %v1518
        %v1522 = vsel %vm746, %v1510, 0
        %1524 = vmatprep.subr.mxu0 0.0
        %1525 = vmatpush1.msra.mxu0 %v1511
        %1526 = vmatprep.subr.mxu0 0.0
        %1527 = vmatpush1.msra.mxu0 %v1512
        %1528 = vmatprep.subr.mxu0 0.0
        %1529 = vmatpush1.msra.mxu0 %v1513
        %1530 = vmatprep.subr.mxu0 0.0
        %1531 = vmatpush1.msra.mxu0 %v1514
        %1532 = vmatprep.subr.mxu0 0.0
        %1533 = vmatpush1.msra.mxu0 0.0
        %1534 = vmatprep.subr.mxu0 0.0
        %1535 = vmatpush1.msra.mxu0 0.0
        %1536 = vmatprep.subr.mxu0 0.0
        %1537 = vmatpush1.msra.mxu0 0.0
        %1538 = vmatprep.subr.mxu0 0.0
        %1539 = vmatpush1.msra.mxu0 0.0
        %1540 = vmatprep.subr.mxu0 0.0
        %1541 = vmatpush1.msra.mxu0 0.0
        %1542 = vmatprep.subr.mxu0 0.0
        %1543 = vmatpush1.msra.mxu0 0.0
        %1544 = vmatprep.subr.mxu0 0.0
        %1545 = vmatpush1.msra.mxu0 0.0
        %1546 = vmatprep.subr.mxu0 0.0
        %1547 = vmatpush1.msra.mxu0 0.0
        %1548 = vmatprep.subr.mxu0 0.0
        %1549 = vmatpush1.msra.mxu0 0.0
        %1550 = vmatprep.subr.mxu0 0.0
        %1551 = vmatpush1.msra.mxu0 0.0
        %1552 = vmatprep.subr.mxu0 0.0
        %1553 = vmatpush1.msra.mxu0 0.0
        %1554 = vmatprep.subr.mxu0 0.0
        %1555 = vmatpush1.msra.mxu0 0.0
        %1556 = vmatprep.subr.mxu0 0.0
        %1557 = vmatpush1.msra.mxu0 0.0
        %1558 = vmatprep.subr.mxu0 0.0
        %1559 = vmatpush1.msra.mxu0 0.0
        %1560 = vmatprep.subr.mxu0 0.0
        %1561 = vmatpush1.msra.mxu0 0.0
        %1562 = vmatprep.subr.mxu0 0.0
        %1563 = vmatpush1.msra.mxu0 0.0
        %1564 = vmatprep.subr.mxu0 0.0
        %1565 = vmatpush1.msra.mxu0 0.0
        %1566 = vmatprep.subr.mxu0 0.0
        %1567 = vmatpush1.msra.mxu0 0.0
        %1568 = vmatprep.subr.mxu0 0.0
        %1569 = vmatpush1.msra.mxu0 0.0
        %1570 = vmatprep.subr.mxu0 0.0
        %1571 = vmatpush1.msra.mxu0 0.0
        %1572 = vmatprep.subr.mxu0 0.0
        %1573 = vmatpush1.msra.mxu0 0.0
        %1574 = vmatprep.subr.mxu0 0.0
        %1575 = vmatpush1.msra.mxu0 0.0
        %1576 = vmatprep.subr.mxu0 0.0
        %1577 = vmatpush1.msra.mxu0 0.0
        %1578 = vmatprep.subr.mxu0 0.0
        %1579 = vmatpush1.msra.mxu0 0.0
        %1580 = vmatprep.subr.mxu0 0.0
        %1581 = vmatpush1.msra.mxu0 0.0
        %1582 = vmatprep.subr.mxu0 0.0
        %1583 = vmatpush1.msra.mxu0 0.0
        %1584 = vmatprep.subr.mxu0 0.0
        %1585 = vmatpush1.msra.mxu0 0.0
        %1586 = vmatprep.subr.mxu0 0.0
        %1587 = vmatpush1.msra.mxu0 0.0
        %1588 = vmatprep.mubr.f32.mxu0 0.0
        %1589 = vmatmul.mubr.f32.gmra.mrb[0].mxu0 %v1522
        %v1590 = vpop.f32.mrb[0].mxu0
        %v1591 = vadd.f32 %v1519, %v1590
        %v1592 = vpop.f32.mrb[0].mxu0
        %1593 = vdwg.mxu0
        %v1594 = vadd.f32 %v1591, %v722
        %v1595 = vsel %vm746, %v1594, 0.0
        %1596 = vadd.xlane.f32.xlu0 %v1595
        %v1597 = vpop.xlane.xlu0 %1596
        %v1598 = vrcp.pop 32.0
        %v1599 = vmul.f32 %v1597, %v1598
        %v1600 = vsub.f32 %v1594, %v1599
        %v1601 = vmul.f32 %v1600, %v1600
        %v1602 = vsel %vm746, %v1601, 0.0
        %1603 = vadd.xlane.f32.xlu0 %v1602
        %v1604 = vpop.xlane.xlu0 %1603
        %v1605 = vmul.f32 %v1604, %v1598
        %v1606 = vadd.f32 %v1605, 1e-12
        %v1607 = vrsqrt.pop %v1606
        %v1608 = vmul.f32 %v1600, %v1607
        %v1610 = vlaneseq
        %v1611 = vshrl.u32 %v1610, 7
        %v1612 = vsub.s32 0, %v1611
        %v1613 = vrot.slane %v726, %v1612
        %v1615 = vmul.f32 %v1608, %v1613
        %v1617 = vlaneseq
        %v1618 = vshrl.u32 %v1617, 7
        %v1619 = vsub.s32 0, %v1618
        %v1620 = vrot.slane %v727, %v1619
        %v1622 = vadd.f32 %v1615, %v1620
        %v1623 = vld [vmem:[%s8] sm:$0xff]
        %v1624 = vld [vmem:[%s8 + $0x8] sm:$0xff]
        %v1625 = vld [vmem:[%s8 + $0x10] sm:$0xff]
        %v1626 = vld [vmem:[%s8 + $0x18] sm:$0xff]
        %v1628 = vlaneseq
        %v1629 = vshrl.u32 %v1628, 7
        %v1630 = vsub.s32 0, %v1629
        %v1631 = vrot.slane %v728, %v1630
        %v1634 = vsel %vm746, %v1622, 0
        %1636 = vmatprep.subr.mxu0 0.0
        %1637 = vmatpush1.msra.mxu0 %v1623
        %1638 = vmatprep.subr.mxu0 0.0
        %1639 = vmatpush1.msra.mxu0 %v1624
        %1640 = vmatprep.subr.mxu0 0.0
        %1641 = vmatpush1.msra.mxu0 %v1625
        %1642 = vmatprep.subr.mxu0 0.0
        %1643 = vmatpush1.msra.mxu0 %v1626
        %1644 = vmatprep.subr.mxu0 0.0
        %1645 = vmatpush1.msra.mxu0 0.0
        %1646 = vmatprep.subr.mxu0 0.0
        %1647 = vmatpush1.msra.mxu0 0.0
        %1648 = vmatprep.subr.mxu0 0.0
        %1649 = vmatpush1.msra.mxu0 0.0
        %1650 = vmatprep.subr.mxu0 0.0
        %1651 = vmatpush1.msra.mxu0 0.0
        %1652 = vmatprep.subr.mxu0 0.0
        %1653 = vmatpush1.msra.mxu0 0.0
        %1654 = vmatprep.subr.mxu0 0.0
        %1655 = vmatpush1.msra.mxu0 0.0
        %1656 = vmatprep.subr.mxu0 0.0
        %1657 = vmatpush1.msra.mxu0 0.0
        %1658 = vmatprep.subr.mxu0 0.0
        %1659 = vmatpush1.msra.mxu0 0.0
        %1660 = vmatprep.subr.mxu0 0.0
        %1661 = vmatpush1.msra.mxu0 0.0
        %1662 = vmatprep.subr.mxu0 0.0
        %1663 = vmatpush1.msra.mxu0 0.0
        %1664 = vmatprep.subr.mxu0 0.0
        %1665 = vmatpush1.msra.mxu0 0.0
        %1666 = vmatprep.subr.mxu0 0.0
        %1667 = vmatpush1.msra.mxu0 0.0
        %1668 = vmatprep.subr.mxu0 0.0
        %1669 = vmatpush1.msra.mxu0 0.0
        %1670 = vmatprep.subr.mxu0 0.0
        %1671 = vmatpush1.msra.mxu0 0.0
        %1672 = vmatprep.subr.mxu0 0.0
        %1673 = vmatpush1.msra.mxu0 0.0
        %1674 = vmatprep.subr.mxu0 0.0
        %1675 = vmatpush1.msra.mxu0 0.0
        %1676 = vmatprep.subr.mxu0 0.0
        %1677 = vmatpush1.msra.mxu0 0.0
        %1678 = vmatprep.subr.mxu0 0.0
        %1679 = vmatpush1.msra.mxu0 0.0
        %1680 = vmatprep.subr.mxu0 0.0
        %1681 = vmatpush1.msra.mxu0 0.0
        %1682 = vmatprep.subr.mxu0 0.0
        %1683 = vmatpush1.msra.mxu0 0.0
        %1684 = vmatprep.subr.mxu0 0.0
        %1685 = vmatpush1.msra.mxu0 0.0
        %1686 = vmatprep.subr.mxu0 0.0
        %1687 = vmatpush1.msra.mxu0 0.0
        %1688 = vmatprep.subr.mxu0 0.0
        %1689 = vmatpush1.msra.mxu0 0.0
        %1690 = vmatprep.subr.mxu0 0.0
        %1691 = vmatpush1.msra.mxu0 0.0
        %1692 = vmatprep.subr.mxu0 0.0
        %1693 = vmatpush1.msra.mxu0 0.0
        %1694 = vmatprep.subr.mxu0 0.0
        %1695 = vmatpush1.msra.mxu0 0.0
        %1696 = vmatprep.subr.mxu0 0.0
        %1697 = vmatpush1.msra.mxu0 0.0
        %1698 = vmatprep.subr.mxu0 0.0
        %1699 = vmatpush1.msra.mxu0 0.0
        %1700 = vmatprep.mubr.f32.mxu0 0.0
        %1701 = vmatmul.mubr.f32.gmra.mrb[0].mxu0 %v1634
        %v1702 = vpop.f32.mrb[0].mxu0
        %v1703 = vadd.f32 %v1631, %v1702
        %v1704 = vpop.f32.mrb[0].mxu0
        %1705 = vdwg.mxu0
        %v1706 = vmul.f32 %v1703, 0.5
        %v1707 = vmul.f32 %v1703, 0.70710677
        %v1708 = verf.f32.pop %v1707
        %v1709 = vadd.f32 %v1708, 1.0
        %v1710 = vmul.f32 %v1706, %v1709
        %v1711 = vld [vmem:[%s10] sm:$0xff]
        %v1712 = vld [vmem:[%s10 + $0x8] sm:$0xff]
        %v1713 = vld [vmem:[%s10 + $0x10] sm:$0xff]
        %v1714 = vld [vmem:[%s10 + $0x18] sm:$0xff]
        %v1715 = vld [vmem:[%s10 + $0x20] sm:$0xff]
        %v1716 = vld [vmem:[%s10 + $0x28] sm:$0xff]
        %v1717 = vld [vmem:[%s10 + $0x30] sm:$0xff]
        %v1718 = vld [vmem:[%s10 + $0x38] sm:$0xff]
        %v1719 = vld [vmem:[%s10 + $0x40] sm:$0xff]
        %v1720 = vld [vmem:[%s10 + $0x48] sm:$0xff]
        %v1721 = vld [vmem:[%s10 + $0x50] sm:$0xff]
        %v1722 = vld [vmem:[%s10 + $0x58] sm:$0xff]
        %v1723 = vld [vmem:[%s10 + $0x60] sm:$0xff]
        %v1724 = vld [vmem:[%s10 + $0x68] sm:$0xff]
        %v1725 = vld [vmem:[%s10 + $0x70] sm:$0xff]
        %v1726 = vld [vmem:[%s10 + $0x78] sm:$0xff]
        %v1728 = vlaneseq
        %v1729 = vshrl.u32 %v1728, 7
        %v1730 = vsub.s32 0, %v1729
        %v1731 = vrot.slane %v729, %v1730
        %1733 = vmatprep.subr.mxu0 0.0
        %1734 = vmatpush1.msra.mxu0 %v1711
        %1735 = vmatprep.subr.mxu0 0.0
        %1736 = vmatpush1.msra.mxu0 %v1712
        %1737 = vmatprep.subr.mxu0 0.0
        %1738 = vmatpush1.msra.mxu0 %v1713
        %1739 = vmatprep.subr.mxu0 0.0
        %1740 = vmatpush1.msra.mxu0 %v1714
        %1741 = vmatprep.subr.mxu0 0.0
        %1742 = vmatpush1.msra.mxu0 %v1715
        %1743 = vmatprep.subr.mxu0 0.0
        %1744 = vmatpush1.msra.mxu0 %v1716
        %1745 = vmatprep.subr.mxu0 0.0
        %1746 = vmatpush1.msra.mxu0 %v1717
        %1747 = vmatprep.subr.mxu0 0.0
        %1748 = vmatpush1.msra.mxu0 %v1718
        %1749 = vmatprep.subr.mxu0 0.0
        %1750 = vmatpush1.msra.mxu0 %v1719
        %1751 = vmatprep.subr.mxu0 0.0
        %1752 = vmatpush1.msra.mxu0 %v1720
        %1753 = vmatprep.subr.mxu0 0.0
        %1754 = vmatpush1.msra.mxu0 %v1721
        %1755 = vmatprep.subr.mxu0 0.0
        %1756 = vmatpush1.msra.mxu0 %v1722
        %1757 = vmatprep.subr.mxu0 0.0
        %1758 = vmatpush1.msra.mxu0 %v1723
        %1759 = vmatprep.subr.mxu0 0.0
        %1760 = vmatpush1.msra.mxu0 %v1724
        %1761 = vmatprep.subr.mxu0 0.0
        %1762 = vmatpush1.msra.mxu0 %v1725
        %1763 = vmatprep.subr.mxu0 0.0
        %1764 = vmatpush1.msra.mxu0 %v1726
        %1765 = vmatprep.subr.mxu0 0.0
        %1766 = vmatpush1.msra.mxu0 0.0
        %1767 = vmatprep.subr.mxu0 0.0
        %1768 = vmatpush1.msra.mxu0 0.0
        %1769 = vmatprep.subr.mxu0 0.0
        %1770 = vmatpush1.msra.mxu0 0.0
        %1771 = vmatprep.subr.mxu0 0.0
        %1772 = vmatpush1.msra.mxu0 0.0
        %1773 = vmatprep.subr.mxu0 0.0
        %1774 = vmatpush1.msra.mxu0 0.0
        %1775 = vmatprep.subr.mxu0 0.0
        %1776 = vmatpush1.msra.mxu0 0.0
        %1777 = vmatprep.subr.mxu0 0.0
        %1778 = vmatpush1.msra.mxu0 0.0
        %1779 = vmatprep.subr.mxu0 0.0
        %1780 = vmatpush1.msra.mxu0 0.0
        %1781 = vmatprep.subr.mxu0 0.0
        %1782 = vmatpush1.msra.mxu0 0.0
        %1783 = vmatprep.subr.mxu0 0.0
        %1784 = vmatpush1.msra.mxu0 0.0
        %1785 = vmatprep.subr.mxu0 0.0
        %1786 = vmatpush1.msra.mxu0 0.0
        %1787 = vmatprep.subr.mxu0 0.0
        %1788 = vmatpush1.msra.mxu0 0.0
        %1789 = vmatprep.subr.mxu0 0.0
        %1790 = vmatpush1.msra.mxu0 0.0
        %1791 = vmatprep.subr.mxu0 0.0
        %1792 = vmatpush1.msra.mxu0 0.0
        %1793 = vmatprep.subr.mxu0 0.0
        %1794 = vmatpush1.msra.mxu0 0.0
        %1795 = vmatprep.subr.mxu0 0.0
        %1796 = vmatpush1.msra.mxu0 0.0
        %1797 = vmatprep.mubr.f32.mxu0 0.0
        %1798 = vmatmul.mubr.f32.gmra.mrb[0].mxu0 %v1710
        %v1799 = vpop.f32.mrb[0].mxu0
        %v1800 = vadd.f32 %v1731, %v1799
        %v1801 = vpop.f32.mrb[0].mxu0
        %1802 = vdwg.mxu0
        %v1803 = vadd.f32 %v1800, %v1622
        %v1804 = vsel %vm746, %v1803, 0.0
        %1805 = vadd.xlane.f32.xlu0 %v1804
        %v1806 = vpop.xlane.xlu0 %1805
        %v1807 = vmul.f32 %v1806, %v1598
        %v1808 = vsub.f32 %v1803, %v1807
        %v1809 = vmul.f32 %v1808, %v1808
        %v1810 = vsel %vm746, %v1809, 0.0
        %1811 = vadd.xlane.f32.xlu0 %v1810
        %v1812 = vpop.xlane.xlu0 %1811
        %v1813 = vmul.f32 %v1812, %v1598
        %v1814 = vadd.f32 %v1813, 1e-12
        %v1815 = vrsqrt.pop %v1814
        %v1816 = vmul.f32 %v1808, %v1815
        %v1818 = vlaneseq
        %v1819 = vshrl.u32 %v1818, 7
        %v1820 = vsub.s32 0, %v1819
        %v1821 = vrot.slane %v730, %v1820
        %v1823 = vmul.f32 %v1816, %v1821
        %v1825 = vlaneseq
        %v1826 = vshrl.u32 %v1825, 7
        %v1827 = vsub.s32 0, %v1826
        %v1828 = vrot.slane %v731, %v1827
        %v1830 = vadd.f32 %v1823, %v1828
        %1831 = vst.msk [vmem:[%s711] sm:$0xff] %vm746, %v1830
        %v1832 = vld [vmem:[%s14] sm:$0xff]
        %v1833 = vld [vmem:[%s14 + $0x8] sm:$0xff]
        %v1834 = vld [vmem:[%s14 + $0x10] sm:$0xff]
        %v1835 = vld [vmem:[%s14 + $0x18] sm:$0xff]
        %v1837 = vlaneseq
        %v1838 = vshrl.u32 %v1837, 7
        %v1839 = vsub.s32 0, %v1838
        %v1840 = vrot.slane %v732, %v1839
        %v1843 = vsel %vm746, %v1830, 0
        %1845 = vmatprep.subr.mxu0 0.0
        %1846 = vmatpush1.msra.mxu0 %v1832
        %1847 = vmatprep.subr.mxu0 0.0
        %1848 = vmatpush1.msra.mxu0 %v1833
        %1849 = vmatprep.subr.mxu0 0.0
        %1850 = vmatpush1.msra.mxu0 %v1834
        %1851 = vmatprep.subr.mxu0 0.0
        %1852 = vmatpush1.msra.mxu0 %v1835
        %1853 = vmatprep.subr.mxu0 0.0
        %1854 = vmatpush1.msra.mxu0 0.0
        %1855 = vmatprep.subr.mxu0 0.0
        %1856 = vmatpush1.msra.mxu0 0.0
        %1857 = vmatprep.subr.mxu0 0.0
        %1858 = vmatpush1.msra.mxu0 0.0
        %1859 = vmatprep.subr.mxu0 0.0
        %1860 = vmatpush1.msra.mxu0 0.0
        %1861 = vmatprep.subr.mxu0 0.0
        %1862 = vmatpush1.msra.mxu0 0.0
        %1863 = vmatprep.subr.mxu0 0.0
        %1864 = vmatpush1.msra.mxu0 0.0
        %1865 = vmatprep.subr.mxu0 0.0
        %1866 = vmatpush1.msra.mxu0 0.0
        %1867 = vmatprep.subr.mxu0 0.0
        %1868 = vmatpush1.msra.mxu0 0.0
        %1869 = vmatprep.subr.mxu0 0.0
        %1870 = vmatpush1.msra.mxu0 0.0
        %1871 = vmatprep.subr.mxu0 0.0
        %1872 = vmatpush1.msra.mxu0 0.0
        %1873 = vmatprep.subr.mxu0 0.0
        %1874 = vmatpush1.msra.mxu0 0.0
        %1875 = vmatprep.subr.mxu0 0.0
        %1876 = vmatpush1.msra.mxu0 0.0
        %1877 = vmatprep.subr.mxu0 0.0
        %1878 = vmatpush1.msra.mxu0 0.0
        %1879 = vmatprep.subr.mxu0 0.0
        %1880 = vmatpush1.msra.mxu0 0.0
        %1881 = vmatprep.subr.mxu0 0.0
        %1882 = vmatpush1.msra.mxu0 0.0
        %1883 = vmatprep.subr.mxu0 0.0
        %1884 = vmatpush1.msra.mxu0 0.0
        %1885 = vmatprep.subr.mxu0 0.0
        %1886 = vmatpush1.msra.mxu0 0.0
        %1887 = vmatprep.subr.mxu0 0.0
        %1888 = vmatpush1.msra.mxu0 0.0
        %1889 = vmatprep.subr.mxu0 0.0
        %1890 = vmatpush1.msra.mxu0 0.0
        %1891 = vmatprep.subr.mxu0 0.0
        %1892 = vmatpush1.msra.mxu0 0.0
        %1893 = vmatprep.subr.mxu0 0.0
        %1894 = vmatpush1.msra.mxu0 0.0
        %1895 = vmatprep.subr.mxu0 0.0
        %1896 = vmatpush1.msra.mxu0 0.0
        %1897 = vmatprep.subr.mxu0 0.0
        %1898 = vmatpush1.msra.mxu0 0.0
        %1899 = vmatprep.subr.mxu0 0.0
        %1900 = vmatpush1.msra.mxu0 0.0
        %1901 = vmatprep.subr.mxu0 0.0
        %1902 = vmatpush1.msra.mxu0 0.0
        %1903 = vmatprep.subr.mxu0 0.0
        %1904 = vmatpush1.msra.mxu0 0.0
        %1905 = vmatprep.subr.mxu0 0.0
        %1906 = vmatpush1.msra.mxu0 0.0
        %1907 = vmatprep.subr.mxu0 0.0
        %1908 = vmatpush1.msra.mxu0 0.0
        %1909 = vmatprep.mubr.f32.mxu0 0.0
        %1910 = vmatmul.mubr.f32.gmra.mrb[0].mxu0 %v1843
        %v1911 = vpop.f32.mrb[0].mxu0
        %v1912 = vadd.f32 %v1840, %v1911
        %v1913 = vpop.f32.mrb[0].mxu0
        %1914 = vdwg.mxu0
        %v1915 = vmul.f32 %v1912, 0.5
        %v1916 = vmul.f32 %v1912, 0.70710677
        %v1917 = verf.f32.pop %v1916
        %v1918 = vadd.f32 %v1917, 1.0
        %v1919 = vmul.f32 %v1915, %v1918
        %v1920 = vsel %vm746, %v1919, 0.0
        %1921 = vadd.xlane.f32.xlu0 %v1920
        %v1922 = vpop.xlane.xlu0 %1921
        %v1923 = vmul.f32 %v1922, %v1598
        %v1924 = vsub.f32 %v1919, %v1923
        %v1925 = vmul.f32 %v1924, %v1924
        %v1926 = vsel %vm746, %v1925, 0.0
        %1927 = vadd.xlane.f32.xlu0 %v1926
        %v1928 = vpop.xlane.xlu0 %1927
        %v1929 = vmul.f32 %v1928, %v1598
        %v1930 = vadd.f32 %v1929, 1e-12
        %v1931 = vrsqrt.pop %v1930
        %v1932 = vmul.f32 %v1924, %v1931
        %v1934 = vlaneseq
        %v1935 = vshrl.u32 %v1934, 7
        %v1936 = vsub.s32 0, %v1935
        %v1937 = vrot.slane %v733, %v1936
        %v1939 = vmul.f32 %v1932, %v1937
        %v1941 = vlaneseq
        %v1942 = vshrl.u32 %v1941, 7
        %v1943 = vsub.s32 0, %v1942
        %v1944 = vrot.slane %v734, %v1943
        %v1946 = vadd.f32 %v1939, %v1944
        %v1947 = vld [vmem:[%s18] sm:$0xff]
        %v1948 = vld [vmem:[%s18 + $0x8] sm:$0xff]
        %v1949 = vld [vmem:[%s18 + $0x10] sm:$0xff]
        %v1950 = vld [vmem:[%s18 + $0x18] sm:$0xff]
        %v1952 = vlaneseq
        %v1953 = vshrl.u32 %v1952, 7
        %v1954 = vsub.s32 0, %v1953
        %v1955 = vrot.slane %v735, %v1954
        %v1958 = vsel %vm746, %v1946, 0
        %1960 = vmatprep.subr.mxu0 0.0
        %1961 = vmatpush1.msra.mxu0 %v1947
        %1962 = vmatprep.subr.mxu0 0.0
        %1963 = vmatpush1.msra.mxu0 %v1948
        %1964 = vmatprep.subr.mxu0 0.0
        %1965 = vmatpush1.msra.mxu0 %v1949
        %1966 = vmatprep.subr.mxu0 0.0
        %1967 = vmatpush1.msra.mxu0 %v1950
        %1968 = vmatprep.subr.mxu0 0.0
        %1969 = vmatpush1.msra.mxu0 0.0
        %1970 = vmatprep.subr.mxu0 0.0
        %1971 = vmatpush1.msra.mxu0 0.0
        %1972 = vmatprep.subr.mxu0 0.0
        %1973 = vmatpush1.msra.mxu0 0.0
        %1974 = vmatprep.subr.mxu0 0.0
        %1975 = vmatpush1.msra.mxu0 0.0
        %1976 = vmatprep.subr.mxu0 0.0
        %1977 = vmatpush1.msra.mxu0 0.0
        %1978 = vmatprep.subr.mxu0 0.0
        %1979 = vmatpush1.msra.mxu0 0.0
        %1980 = vmatprep.subr.mxu0 0.0
        %1981 = vmatpush1.msra.mxu0 0.0
        %1982 = vmatprep.subr.mxu0 0.0
        %1983 = vmatpush1.msra.mxu0 0.0
        %1984 = vmatprep.subr.mxu0 0.0
        %1985 = vmatpush1.msra.mxu0 0.0
        %1986 = vmatprep.subr.mxu0 0.0
        %1987 = vmatpush1.msra.mxu0 0.0
        %1988 = vmatprep.subr.mxu0 0.0
        %1989 = vmatpush1.msra.mxu0 0.0
        %1990 = vmatprep.subr.mxu0 0.0
        %1991 = vmatpush1.msra.mxu0 0.0
        %1992 = vmatprep.subr.mxu0 0.0
        %1993 = vmatpush1.msra.mxu0 0.0
        %1994 = vmatprep.subr.mxu0 0.0
        %1995 = vmatpush1.msra.mxu0 0.0
        %1996 = vmatprep.subr.mxu0 0.0
        %1997 = vmatpush1.msra.mxu0 0.0
        %1998 = vmatprep.subr.mxu0 0.0
        %1999 = vmatpush1.msra.mxu0 0.0
        %2000 = vmatprep.subr.mxu0 0.0
        %2001 = vmatpush1.msra.mxu0 0.0
        %2002 = vmatprep.subr.mxu0 0.0
        %2003 = vmatpush1.msra.mxu0 0.0
        %2004 = vmatprep.subr.mxu0 0.0
        %2005 = vmatpush1.msra.mxu0 0.0
        %2006 = vmatprep.subr.mxu0 0.0
        %2007 = vmatpush1.msra.mxu0 0.0
        %2008 = vmatprep.subr.mxu0 0.0
        %2009 = vmatpush1.msra.mxu0 0.0
        %2010 = vmatprep.subr.mxu0 0.0
        %2011 = vmatpush1.msra.mxu0 0.0
        %2012 = vmatprep.subr.mxu0 0.0
        %2013 = vmatpush1.msra.mxu0 0.0
        %2014 = vmatprep.subr.mxu0 0.0
        %2015 = vmatpush1.msra.mxu0 0.0
        %2016 = vmatprep.subr.mxu0 0.0
        %2017 = vmatpush1.msra.mxu0 0.0
        %2018 = vmatprep.subr.mxu0 0.0
        %2019 = vmatpush1.msra.mxu0 0.0
        %2020 = vmatprep.subr.mxu0 0.0
        %2021 = vmatpush1.msra.mxu0 0.0
        %2022 = vmatprep.subr.mxu0 0.0
        %2023 = vmatpush1.msra.mxu0 0.0
        %2024 = vmatprep.mubr.f32.mxu0 0.0
        %2025 = vmatmul.mubr.f32.gmra.mrb[0].mxu0 %v1958
        %v2026 = vpop.f32.mrb[0].mxu0
        %v2027 = vadd.f32 %v1955, %v2026
        %v2028 = vpop.f32.mrb[0].mxu0
        %2029 = vdwg.mxu0
        %2030 = vst [vmem:[%s718] sm:$0xff] %v2027
        %s2031 = sand.u32 %s481, 1
        %s2032 = scalar_lea.sflag [#allocation4], %s2031
        %s2033 = sand.u32 %s481, 1
        %s2034 = smul.addr %s2033, 8
        %s2035 = scalar_lea.vmem [#allocation8], %s2034
        %s2036 = sand.u32 %s507, 1
        %s2037 = scalar_lea.sflag [#allocation10], %s2036
        %s2038 = sand.u32 %s507, 1
        %s2039 = smul.addr %s2038, 8
        %s2040 = scalar_lea.vmem [#allocation9], %s2039
        // Predicated region
        $region113: #{tpu_custom_call.1} parent=99 // pred_check
          %p2041 = pneg %p491
        $region114: #{tpu_custom_call.1} parent=99 // pred_check_branch
          %2043 = sbr.rel (%p2041) target = $region116
        $region115: #{tpu_custom_call.1} parent=99 // pred_region
          %s2045 = ssub.s32 128, 128
          %2046 = vsyncadd %s2032, %s2045
          %s2047 = smul.addr %s43, 128
          %s2048 = scalar_lea.hbm %s20, %s2047
          %s2050 = sshll.u32 %s2035, 4
          %s2051 = int_to_ptr.vmem [resolvable:$true] %s2050
          %2053 = dma.vmem_to_hbm [thread:$0]  %s2051, 128, %s2048, %s2032
        $region116: #{tpu_custom_call.1} parent=99 // pred_fallthru
          _
        // Predicated region
        $region117: #{tpu_custom_call.1} parent=99 // pred_check
          %p2054 = pneg %p517
        $region118: #{tpu_custom_call.1} parent=99 // pred_check_branch
          %2056 = sbr.rel (%p2054) target = $region120
        $region119: #{tpu_custom_call.1} parent=99 // pred_region
          %s2058 = ssub.s32 128, 128
          %2059 = vsyncadd %s2037, %s2058
          %s2060 = smul.addr %s43, 128
          %s2061 = scalar_lea.hbm %s21, %s2060
          %s2063 = sshll.u32 %s2040, 4
          %s2064 = int_to_ptr.vmem [resolvable:$true] %s2063
          %2066 = dma.vmem_to_hbm [thread:$0]  %s2064, 128, %s2061, %s2037
        $region120: #{tpu_custom_call.1} parent=99 // pred_fallthru
          _
      $region100: #{tpu_custom_call.1} parent=5 // pred_fallthru
        _
      %p2067 = scmp.le.s32.totalorder 2, %s38
      // Predicated region
      $region121: #{tpu_custom_call.1} parent=5 // pred_check
        %p2068 = pneg %p2067
      $region122: #{tpu_custom_call.1} parent=5 // pred_check_branch
        %2070 = sbr.rel (%p2068) target = $region124
      $region123: #{tpu_custom_call.1} parent=5 // pred_region
        %s2071 = ssub.s32 %s38, 2
        // Predicated region
        $region125: #{tpu_custom_call.1} parent=123 // pred_check
          %p2072 = pneg %p497
        $region126: #{tpu_custom_call.1} parent=123 // pred_check_branch
          %2074 = sbr.rel (%p2072) target = $region128
        $region127: #{tpu_custom_call.1} parent=123 // pred_region
          %s2075 = sand.u32 %s482, 1
          %s2076 = scalar_lea.sflag [#allocation4], %s2075
          %s2077 = sand.u32 %s482, 1
          %s2078 = smul.addr %s2077, 8
          %s2079 = scalar_lea.vmem [#allocation8], %s2078
          %2080 = dma.done %s2076, 128
        $region128: #{tpu_custom_call.1} parent=123 // pred_fallthru
          _
        // Predicated region
        $region129: #{tpu_custom_call.1} parent=123 // pred_check
          %p2081 = pneg %p523
        $region130: #{tpu_custom_call.1} parent=123 // pred_check_branch
          %2083 = sbr.rel (%p2081) target = $region132
        $region131: #{tpu_custom_call.1} parent=123 // pred_region
          %s2084 = sand.u32 %s508, 1
          %s2085 = scalar_lea.sflag [#allocation10], %s2084
          %s2086 = sand.u32 %s508, 1
          %s2087 = smul.addr %s2086, 8
          %s2088 = scalar_lea.vmem [#allocation9], %s2087
          %2089 = dma.done %s2085, 128
        $region132: #{tpu_custom_call.1} parent=123 // pred_fallthru
          _
      $region124: #{tpu_custom_call.1} parent=5 // pred_fallthru
        _
    $region6: #{tpu_custom_call.1} parent=1 // loop_footer
      %s42 = sadd.s32 1, %s38
    $region7: #{tpu_custom_call.1} parent=1 // loop_footer_branch
      %37 = sbr.rel target = $region3
    $region8: #{tpu_custom_call.1} parent=1 // loop_exit
      _
    %2090 = vsyncpa [#allocation3], 1
    %s2091 = scalar_lea.sflag [#allocation3], 1
    %2092 = vsyncpa %s2091, 1
    %2093 = vsyncpa [#allocation6], 1
    %2094 = vsyncpa [#allocation4], 1
    %s2095 = scalar_lea.sflag [#allocation4], 1
    %2096 = vsyncpa %s2095, 1
    %2097 = vsyncpa [#allocation10], 1
    %s2098 = scalar_lea.sflag [#allocation10], 1
    %2099 = vsyncpa %s2098, 1

</llo_original>
